<compile_context>
chip_gen: v5e
topology: v5e:2x2
jax: 0.10.0
libtpu: 0.0.40
codegen_flags: <defaults>
</compile_context>

<pallas_src>
import jax
import jax.numpy as jnp
from jax.experimental import pallas as pl
from jax.experimental.pallas import tpu as pltpu


def _round_up(x, m):
    return ((x + m - 1) // m) * m


# ----------------------------- kernels ------------------------------------ #

def _proj_kernel(inp_ref, w_ref, a_src_ref, a_dst_ref, h_ref, f_ref, g_ref):
    """h = inp @ W ; f = h . a_src ; g = h . a_dst  (per row tile)."""
    h32 = jnp.dot(inp_ref[...], w_ref[...], preferred_element_type=jnp.float32)
    # Store h in compute_dtype (bf16 fast path): halves HBM write+read and the
    # resident VMEM slab in pass 2.
    h_ref[...] = h32.astype(h_ref.dtype)
    # a-vector projections from the f32 accumulator: VPU multiply + lane reduce
    # (no width-1 MXU matvecs, no in-kernel transpose).
    f_ref[...] = jnp.sum(h32 * a_src_ref[...], axis=1, keepdims=True)
    g_ref[...] = jnp.sum(h32 * a_dst_ref[...], axis=1, keepdims=True)


def _leaky_relu(e, alpha):
    if 0.0 <= alpha <= 1.0:
        return jnp.maximum(e, alpha * e)        # vmul + vmax (cheaper than select)
    return jnp.where(e > 0, e, alpha * e)


def _make_attn_kernel(alpha, concat, compute_dtype, ew_dtype, approx_recip):
    """Resident-h variant: masked softmax + aggregation for one row tile."""

    def kernel(adj_ref, h_ref, f_ref, g_ref, out_ref):
        # e[i, j] = leakyrelu(f_i + g_j); elementwise chain in ew_dtype
        # (bf16 fast path on v6e/v7x), reductions in f32.
        f = f_ref[...].astype(ew_dtype)                 # (TM, 1)
        g = g_ref[...].astype(ew_dtype)                 # (1, N_pad)
        e = _leaky_relu(f + g, alpha)
        att = jnp.where(adj_ref[...] > 0, e, -1.0e12)   # adjacency mask
        m = jnp.max(att, axis=1, keepdims=True)
        p = jnp.exp(att - m)                            # EUP
        denom = jnp.sum(p.astype(jnp.float32), axis=1, keepdims=True)
        # h_ref is already in compute_dtype: no per-step (N, F) cast.
        hp = jnp.dot(p.astype(compute_dtype), h_ref[...],
                     preferred_element_type=jnp.float32)
        # Fold normalization into the (TM, F_pad) result, not the (TM, N) tile.
        if approx_recip:
            hp = hp * pl.reciprocal(denom, approx=True)
        else:
            hp = hp / denom
        if concat:
            hp = jnp.where(hp > 0, hp, jnp.expm1(hp))   # ELU
        out_ref[...] = hp.astype(out_ref.dtype)

    return kernel


def _make_flash_attn_kernel(alpha, concat, compute_dtype, ew_dtype, approx_recip):
    """Flash-style variant: online softmax over j tiles (large N)."""

    def kernel(adj_ref, h_ref, f_ref, g_ref, out_ref, m_sc, l_sc, acc_sc):
        j = pl.program_id(1)

        @pl.when(j == 0)
        def _():
            m_sc[...] = jnp.full(m_sc.shape, -jnp.inf, m_sc.dtype)
            l_sc[...] = jnp.zeros(l_sc.shape, l_sc.dtype)
            acc_sc[...] = jnp.zeros(acc_sc.shape, acc_sc.dtype)

        f = f_ref[...].astype(ew_dtype)                 # (TM, 1)
        g = g_ref[...].astype(ew_dtype)                 # (1, TN)
        e = _leaky_relu(f + g, alpha)
        att = jnp.where(adj_ref[...] > 0, e, -1.0e12)

        m_prev = m_sc[...]
        m_new = jnp.maximum(
            m_prev, jnp.max(att, axis=1, keepdims=True).astype(jnp.float32))
        corr = jnp.exp(m_prev - m_new)
        p = jnp.exp(att - m_new.astype(ew_dtype))
        l_sc[...] = corr * l_sc[...] + jnp.sum(
            p.astype(jnp.float32), axis=1, keepdims=True)
        acc_sc[...] = corr * acc_sc[...] + jnp.dot(
            p.astype(compute_dtype), h_ref[...],
            preferred_element_type=jnp.float32)
        m_sc[...] = m_new

        @pl.when(j == pl.num_programs(1) - 1)
        def _():
            if approx_recip:
                hp = acc_sc[...] * pl.reciprocal(l_sc[...], approx=True)
            else:
                hp = acc_sc[...] / l_sc[...]
            if concat:
                hp = jnp.where(hp > 0, hp, jnp.expm1(hp))
            out_ref[...] = hp.astype(out_ref.dtype)

    return kernel


# --------------------------- planning helpers ------------------------------ #

def _resident_pass2_bytes(tm, n_pad, f_pad, h_bytes, ew_bytes):
    return (n_pad * f_pad * h_bytes              # resident h (single-buffered)
            + 2 * tm * n_pad * 1                 # int8 adj tile, double-buffered
            + 2 * tm * f_pad * 4                 # f32 out tile, double-buffered
            + tm * n_pad * (3 * ew_bytes + 4)    # e/att/p live + f32 sum operand
            + n_pad * 4 + 4 * tm * 4)


def _flash_pass2_bytes(tm, tn, f_pad, h_bytes, ew_bytes):
    return (2 * tn * f_pad * h_bytes             # h j-tile, double-buffered
            + 2 * tm * tn * 1                    # int8 adj tile, double-buffered
            + 2 * tm * f_pad * 4                 # f32 out tile, double-buffered
            + tm * f_pad * 4 + 2 * tm * 4        # acc / m / l scratch
            + tm * tn * (3 * ew_bytes + 4)       # per-step intermediates
            + 2 * tn * 4 + 4 * tm * 4)


def _choose_plan(n_pad, f_pad, h_bytes, ew_bytes, budget, force_flash):
    # >= 2 row tiles whenever possible so the "parallel" axis feeds both
    # TensorCores on v7x (no effect on single-TC v5e/v6e).
    max_tm = n_pad if n_pad < 256 else n_pad // 2
    tms = [t for t in (512, 256, 128) if t <= max_tm and n_pad % t == 0]
    if not tms:
        tms = [min(n_pad, 128)]
    if not force_flash:
        for tm in tms:
            if _resident_pass2_bytes(tm, n_pad, f_pad, h_bytes, ew_bytes) <= budget:
                return "resident", tm, None
    tns = [t for t in (2048, 1024, 512, 256, 128) if t <= n_pad and n_pad % t == 0]
    for tm in tms:
        for tn in tns:
            if _flash_pass2_bytes(tm, tn, f_pad, h_bytes, ew_bytes) <= budget:
                return "flash", tm, tn
    return "flash", tms[-1], min(n_pad, 128)


def _invariant_spec(shape, index_map, single_buffer):
    """BlockSpec for a grid-invariant operand; single-buffer it if requested."""
    if single_buffer:
        return pl.BlockSpec(shape, index_map, pipeline_mode=pl.Buffered(1))
    return pl.BlockSpec(shape, index_map)


# ------------------------------- forward ----------------------------------- #

def _gat_forward(inp, adj, W, a, *, alpha, concat, compute_dtype, ew_dtype,
                 approx_reciprocal, force_flash, flash_tile_n,
                 single_buffer_invariant):
    N, K = inp.shape
    F = W.shape[1]
    f32 = jnp.float32

    N_pad = _round_up(N, 128)
    F_pad = _round_up(F, 128)                    # lane-dense output slab
    h_bytes = jnp.dtype(compute_dtype).itemsize
    ew_bytes = jnp.dtype(ew_dtype).itemsize

    # Generation-aware VMEM budget (v5e/v6e: 128 MiB, v7x: 64 MiB); leave ~20%
    # headroom for Mosaic internal scratch / semaphores.
    try:
        vmem_cap = int(pltpu.get_tpu_info().vmem_capacity_bytes)
    except Exception:
        vmem_cap = 64 * 2**20
    budget = int(0.8 * vmem_cap)

    plan, TM, TN = _choose_plan(N_pad, F_pad, h_bytes, ew_bytes, budget,
                                force_flash or (flash_tile_n is not None))
    if flash_tile_n is not None:                 # test hook for the flash path
        TN = int(flash_tile_n)
        if N_pad % TN != 0 or TN % 128 != 0:
            raise ValueError("flash_tile_n must be a multiple of 128 dividing N_pad")
    n_row_tiles = N_pad // TM

    # ---- pad / cast inputs (adjacency accepted as bool/int8 at the API) ----
    inp_p = jnp.zeros((N_pad, K), compute_dtype).at[:N, :].set(
        inp.astype(compute_dtype))
    W_p = jnp.zeros((K, F_pad), compute_dtype).at[:, :F].set(
        W.astype(compute_dtype))
    a_src = jnp.zeros((1, F_pad), f32).at[0, :F].set(a[:F, 0].astype(f32))
    a_dst = jnp.zeros((1, F_pad), f32).at[0, :F].set(a[F:2 * F, 0].astype(f32))
    if adj.dtype == jnp.bool_:
        adj_i8 = adj.astype(jnp.int8)
    elif adj.dtype == jnp.int8:
        adj_i8 = adj
    else:                                        # prefer bool/int8 upstream
        adj_i8 = (adj > 0).astype(jnp.int8)
    adj_p = jnp.zeros((N_pad, N_pad), jnp.int8).at[:N, :N].set(adj_i8)

    cparams = pltpu.CompilerParams(
        dimension_semantics=("parallel",),       # independent row tiles
        vmem_limit_bytes=budget,
    )

    def inv_spec(shape, index_map):
        return _invariant_spec(shape, index_map, single_buffer_invariant)

    # ---- pass 1: linear transform + attention-vector projections ----
    h, f_col, g_col = pl.pallas_call(
        _proj_kernel,
        grid=(n_row_tiles,),
        in_specs=[
            pl.BlockSpec((TM, K), lambda i: (i, 0)),        # inp row tile
            inv_spec((K, F_pad), lambda i: (0, 0)),         # W (grid-invariant)
            inv_spec((1, F_pad), lambda i: (0, 0)),         # a_src
            inv_spec((1, F_pad), lambda i: (0, 0)),         # a_dst
        ],
        out_specs=(
            pl.BlockSpec((TM, F_pad), lambda i: (i, 0)),    # h (compute_dtype)
            pl.BlockSpec((TM, 1), lambda i: (i, 0)),        # f = h . a_src
            pl.BlockSpec((TM, 1), lambda i: (i, 0)),        # g = h . a_dst
        ),
        out_shape=(
            jax.ShapeDtypeStruct((N_pad, F_pad), compute_dtype),
            jax.ShapeDtypeStruct((N_pad, 1), f32),
            jax.ShapeDtypeStruct((N_pad, 1), f32),
        ),
        compiler_params=cparams,
    )(inp_p, W_p, a_src, a_dst)

    # Tiny (N_pad*4-byte) relayout so the attention kernels never transpose.
    g_row = g_col.reshape(1, N_pad)

    # ---- pass 2: masked softmax attention + aggregation ----
    if plan == "resident":
        out_pad = pl.pallas_call(
            _make_attn_kernel(float(alpha), bool(concat), compute_dtype,
                              ew_dtype, approx_reciprocal),
            grid=(n_row_tiles,),
            in_specs=[
                pl.BlockSpec((TM, N_pad), lambda i: (i, 0)),    # adj tile (int8)
                inv_spec((N_pad, F_pad), lambda i: (0, 0)),     # h resident
                pl.BlockSpec((TM, 1), lambda i: (i, 0)),        # f tile
                inv_spec((1, N_pad), lambda i: (0, 0)),         # g row, resident
            ],
            out_specs=pl.BlockSpec((TM, F_pad), lambda i: (i, 0)),
            out_shape=jax.ShapeDtypeStruct((N_pad, F_pad), f32),
            compiler_params=cparams,
        )(adj_p, h, f_col, g_row)
    else:
        n_col_tiles = N_pad // TN
        cparams2 = pltpu.CompilerParams(
            dimension_semantics=("parallel", "arbitrary"),
            vmem_limit_bytes=budget,
        )
        out_pad = pl.pallas_call(
            _make_flash_attn_kernel(float(alpha), bool(concat), compute_dtype,
                                    ew_dtype, approx_reciprocal),
            grid=(n_row_tiles, n_col_tiles),
            in_specs=[
                pl.BlockSpec((TM, TN), lambda i, j: (i, j)),        # adj tile
                pl.BlockSpec((TN, F_pad), lambda i, j: (j, 0)),     # h j-tile
                pl.BlockSpec((TM, 1), lambda i, j: (i, 0)),         # f tile
                pl.BlockSpec((1, TN), lambda i, j: (0, j)),         # g j-slice
            ],
            out_specs=pl.BlockSpec((TM, F_pad), lambda i, j: (i, 0)),
            out_shape=jax.ShapeDtypeStruct((N_pad, F_pad), f32),
            scratch_shapes=[
                pltpu.VMEM((TM, 1), f32),       # running max m
                pltpu.VMEM((TM, 1), f32),       # running denom l
                pltpu.VMEM((TM, F_pad), f32),   # running numerator acc
            ],
            compiler_params=cparams2,
        )(adj_p, h, f_col, g_row)

    return out_pad[:N, :F]


def gat_layer(inp, adj, W, a, *, alpha=0.2, concat=True,
              compute_dtype=jnp.bfloat16, elementwise_dtype=None,
              approx_reciprocal=True, force_flash=False, flash_tile_n=None):
    """GAT layer forward pass (eval mode) using row-tiled Pallas TPU kernels.

    elementwise_dtype defaults to compute_dtype (bf16 softmax chain on v6e/v7x);
    pass jnp.float32 on v5e (no bf16 VPU/EUP) or for extra precision.
    """
    ew_dtype = compute_dtype if elementwise_dtype is None else elementwise_dtype
    kwargs = dict(alpha=float(alpha), concat=bool(concat),
                  compute_dtype=compute_dtype, ew_dtype=ew_dtype,
                  approx_reciprocal=bool(approx_reciprocal),
                  force_flash=bool(force_flash), flash_tile_n=flash_tile_n)
    try:
        return _gat_forward(inp, adj, W, a, single_buffer_invariant=True, **kwargs)
    except Exception:
        # pl.Buffered(1) single-buffering of grid-invariant operands may be
        # unsupported on some jax/Mosaic versions; retry with defaults.
        return _gat_forward(inp, adj, W, a, single_buffer_invariant=False, **kwargs)


# ------------------------------ reference ---------------------------------- #

def xavier_uniform(key, shape, gain=1.414):
    fan_in, fan_out = shape[0], shape[1]
    bound = gain * jnp.sqrt(6.0 / (fan_in + fan_out))
    return jax.random.uniform(key, shape, jnp.float32, -bound, bound)


def gat_reference(inp, adj, W, a, *, alpha=0.2, concat=True):
    """Pure-JAX reference mirroring the PyTorch forward (eval mode)."""
    h = inp @ W
    N, out_features = h.shape
    a_input = jnp.concatenate(
        [jnp.repeat(h, N, axis=0), jnp.tile(h, (N, 1))], axis=1
    ).reshape(N, N, 2 * out_features)
    e = jnp.squeeze(a_input @ a, axis=2)
    e = jnp.where(e > 0, e, alpha * e)
    att = jnp.where(adj > 0, e, -1.0e12 * jnp.ones_like(e))
    att = jax.nn.softmax(att, axis=1)
    h_prime = att @ h
    if concat:
        h_prime = jnp.where(h_prime > 0, h_prime, jnp.exp(h_prime) - 1.0)
    return h_prime


if __name__ == "__main__":
    # Small, module-consistent shapes; N=200 pads to 256 -> 2 row tiles.
    N, in_features, out_features = 200, 16, 32
    alpha, concat = 0.2, True                    # dropout unused (eval mode)

    key = jax.random.PRNGKey(0)
    k_w, k_a, k_x, k_adj = jax.random.split(key, 4)

    W = xavier_uniform(k_w, (in_features, out_features))
    a = xavier_uniform(k_a, (2 * out_features, 1))
    inp = jax.random.normal(k_x, (N, in_features), jnp.float32)
    # Boolean adjacency with self-loops (bool/int8 at the API boundary -> no
    # O(N^2) f32 read in the wrapper).
    adj = (jax.random.uniform(k_adj, (N, N)) > 0.5) | jnp.eye(N, dtype=bool)

    ref = gat_reference(inp, adj, W, a, alpha=alpha, concat=concat)

    # f32 path, resident pass 2: tight semantics check.
    out_f32 = jax.block_until_ready(
        gat_layer(inp, adj, W, a, alpha=alpha, concat=concat,
                  compute_dtype=jnp.float32))
    assert out_f32.shape == (N, out_features)
    assert jnp.allclose(out_f32, ref, atol=1e-2, rtol=1e-2), "f32 mismatch"

    # Flash-style (online-softmax over j tiles) pass 2, forced at small N to
    # exercise the large-N path; f32 for a tight check.
    out_flash = jax.block_until_ready(
        gat_layer(inp, adj, W, a, alpha=alpha, concat=concat,
                  compute_dtype=jnp.float32, force_flash=True,
                  flash_tile_n=128))
    assert jnp.allclose(out_flash, ref, atol=1e-2, rtol=1e-2), "flash mismatch"

    # bf16 fast path: bf16 h storage, bf16 MXU operands, bf16 softmax
    # elementwise chain (reductions/normalization in f32).
    out_bf16 = jax.block_until_ready(
        gat_layer(inp, adj, W, a, alpha=alpha, concat=concat))
    assert out_bf16.shape == (N, out_features)
    assert jnp.allclose(out_bf16, ref, atol=1e-1, rtol=1e-1), "bf16 mismatch"

    # concat=False branch (no ELU).
    ref_nc = gat_reference(inp, adj, W, a, alpha=alpha, concat=False)
    out_nc = jax.block_until_ready(
        gat_layer(inp, adj, W, a, alpha=alpha, concat=False,
                  compute_dtype=jnp.float32))
    assert jnp.allclose(out_nc, ref_nc, atol=1e-2, rtol=1e-2), "concat=False mismatch"

    print("KERNEL_OK")
</pallas_src>

<mosaic_0001>
module attributes {stable_mosaic.version = 11 : i64} {
  func.func @_proj_kernel(%arg0: i32, %arg1: memref<128x16xf32, #tpu.memory_space<vmem>>, %arg2: memref<16x128xf32, #tpu.memory_space<vmem>>, %arg3: memref<1x128xf32, #tpu.memory_space<vmem>>, %arg4: memref<1x128xf32, #tpu.memory_space<vmem>>, %arg5: memref<128x128xf32, #tpu.memory_space<vmem>>, %arg6: memref<128x1xf32, #tpu.memory_space<vmem>>, %arg7: memref<128x1xf32, #tpu.memory_space<vmem>>) attributes {dimension_semantics = [#tpu.dimension_semantics<parallel>], iteration_bounds = array<i64: 2>, scalar_prefetch = 0 : i64, scratch_operands = 0 : i64, tpu.core_type = #tpu.core_type<tc>, window_params = [{transform_indices = @transform_0, window_bounds = array<i64: 128, 16>}, {pipeline_mode = #tpu.pipeline_mode<synchronous>, transform_indices = @transform_1, window_bounds = array<i64: 16, 128>}, {pipeline_mode = #tpu.pipeline_mode<synchronous>, transform_indices = @transform_2, window_bounds = array<i64: 1, 128>}, {pipeline_mode = #tpu.pipeline_mode<synchronous>, transform_indices = @transform_3, window_bounds = array<i64: 1, 128>}, {transform_indices = @transform_4, window_bounds = array<i64: 128, 128>}, {transform_indices = @transform_5, window_bounds = array<i64: 128, 1>}, {transform_indices = @transform_6, window_bounds = array<i64: 128, 1>}]} {
    %c0 = arith.constant 0 : index
    %c0_0 = arith.constant 0 : index
    %0 = vector.load %arg1[%c0, %c0_0] : memref<128x16xf32, #tpu.memory_space<vmem>>, vector<128x16xf32>
    %c0_1 = arith.constant 0 : index
    %c0_2 = arith.constant 0 : index
    %1 = vector.load %arg2[%c0_1, %c0_2] : memref<16x128xf32, #tpu.memory_space<vmem>>, vector<16x128xf32>
    %cst = arith.constant dense<0.000000e+00> : vector<128x128xf32>
    %2 = tpu.matmul %0, %1, %cst {dimension_numbers = #tpu.dot_dimension_numbers<[1], [0], [0], [1], [0, 0, 1, 1], [], []>} : vector<128x16xf32>, vector<16x128xf32>, vector<128x128xf32> -> vector<128x128xf32>
    %c0_3 = arith.constant 0 : index
    %c0_4 = arith.constant 0 : index
    %3 = vector.load %arg5[%c0_3, %c0_4] : memref<128x128xf32, #tpu.memory_space<vmem>>, vector<128x128xf32>
    tpu.vector_store %arg5[%c0_3, %c0_4], %2 {strides = array<i32>} : memref<128x128xf32, #tpu.memory_space<vmem>>, vector<128x128xf32>,
    %c0_5 = arith.constant 0 : index
    %c0_6 = arith.constant 0 : index
    %4 = vector.load %arg3[%c0_5, %c0_6] : memref<1x128xf32, #tpu.memory_space<vmem>>, vector<1x128xf32>
    %5 = vector.broadcast %4 : vector<1x128xf32> to vector<128x128xf32>
    %6 = arith.mulf %2, %5 : vector<128x128xf32>
    %cst_7 = arith.constant dense<0.000000e+00> : vector<128xf32>
    %7 = vector.multi_reduction <add>, %6, %cst_7 [1] : vector<128x128xf32> to vector<128xf32>
    %8 = vector.shape_cast %7 : vector<128xf32> to vector<128x1xf32>
    %c0_8 = arith.constant 0 : index
    %c0_9 = arith.constant 0 : index
    %9 = vector.load %arg6[%c0_8, %c0_9] : memref<128x1xf32, #tpu.memory_space<vmem>>, vector<128x1xf32>
    tpu.vector_store %arg6[%c0_8, %c0_9], %8 {strides = array<i32>} : memref<128x1xf32, #tpu.memory_space<vmem>>, vector<128x1xf32>,
    %c0_10 = arith.constant 0 : index
    %c0_11 = arith.constant 0 : index
    %10 = vector.load %arg4[%c0_10, %c0_11] : memref<1x128xf32, #tpu.memory_space<vmem>>, vector<1x128xf32>
    %11 = vector.broadcast %10 : vector<1x128xf32> to vector<128x128xf32>
    %12 = arith.mulf %2, %11 : vector<128x128xf32>
    %cst_12 = arith.constant dense<0.000000e+00> : vector<128xf32>
    %13 = vector.multi_reduction <add>, %12, %cst_12 [1] : vector<128x128xf32> to vector<128xf32>
    %14 = vector.shape_cast %13 : vector<128xf32> to vector<128x1xf32>
    %c0_13 = arith.constant 0 : index
    %c0_14 = arith.constant 0 : index
    %15 = vector.load %arg7[%c0_13, %c0_14] : memref<128x1xf32, #tpu.memory_space<vmem>>, vector<128x1xf32>
    tpu.vector_store %arg7[%c0_13, %c0_14], %14 {strides = array<i32>} : memref<128x1xf32, #tpu.memory_space<vmem>>, vector<128x1xf32>,
    return
  }
  func.func @transform_0(%arg0: i32) -> (i32, i32) {
    %c0_i32 = arith.constant 0 : i32
    %c0_i32_0 = arith.constant 0 : i32
    return %arg0, %c0_i32 : i32, i32
  }
  func.func @transform_1(%arg0: i32) -> (i32, i32) {
    %c0_i32 = arith.constant 0 : i32
    %c0_i32_0 = arith.constant 0 : i32
    %c0_i32_1 = arith.constant 0 : i32
    return %c0_i32, %c0_i32_0 : i32, i32
  }
  func.func @transform_2(%arg0: i32) -> (i32, i32) {
    %c0_i32 = arith.constant 0 : i32
    %c0_i32_0 = arith.constant 0 : i32
    %c0_i32_1 = arith.constant 0 : i32
    return %c0_i32, %c0_i32_0 : i32, i32
  }
  func.func @transform_3(%arg0: i32) -> (i32, i32) {
    %c0_i32 = arith.constant 0 : i32
    %c0_i32_0 = arith.constant 0 : i32
    %c0_i32_1 = arith.constant 0 : i32
    return %c0_i32, %c0_i32_0 : i32, i32
  }
  func.func @transform_4(%arg0: i32) -> (i32, i32) {
    %c0_i32 = arith.constant 0 : i32
    %c0_i32_0 = arith.constant 0 : i32
    return %arg0, %c0_i32 : i32, i32
  }
  func.func @transform_5(%arg0: i32) -> (i32, i32) {
    %c0_i32 = arith.constant 0 : i32
    %c0_i32_0 = arith.constant 0 : i32
    return %arg0, %c0_i32 : i32, i32
  }
  func.func @transform_6(%arg0: i32) -> (i32, i32) {
    %c0_i32 = arith.constant 0 : i32
    %c0_i32_0 = arith.constant 0 : i32
    return %arg0, %c0_i32 : i32, i32
  }
}

module attributes {stable_mosaic.version = 11 : i64} {
  func.func @_proj_kernel(%arg0: i32, %arg1: memref<128x16xf32, #tpu.memory_space<vmem>>, %arg2: memref<16x128xf32, #tpu.memory_space<vmem>>, %arg3: memref<1x128xf32, #tpu.memory_space<vmem>>, %arg4: memref<1x128xf32, #tpu.memory_space<vmem>>, %arg5: memref<128x128xf32, #tpu.memory_space<vmem>>, %arg6: memref<128x1xf32, #tpu.memory_space<vmem>>, %arg7: memref<128x1xf32, #tpu.memory_space<vmem>>) attributes {dimension_semantics = [#tpu.dimension_semantics<parallel>], iteration_bounds = array<i64: 2>, scalar_prefetch = 0 : i64, scratch_operands = 0 : i64, tpu.core_type = #tpu.core_type<tc>, window_params = [{transform_indices = @transform_0, window_bounds = array<i64: 128, 16>}, {pipeline_mode = #tpu.pipeline_mode<synchronous>, transform_indices = @transform_1, window_bounds = array<i64: 16, 128>}, {pipeline_mode = #tpu.pipeline_mode<synchronous>, transform_indices = @transform_2, window_bounds = array<i64: 1, 128>}, {pipeline_mode = #tpu.pipeline_mode<synchronous>, transform_indices = @transform_3, window_bounds = array<i64: 1, 128>}, {transform_indices = @transform_4, window_bounds = array<i64: 128, 128>}, {transform_indices = @transform_5, window_bounds = array<i64: 128, 1>}, {transform_indices = @transform_6, window_bounds = array<i64: 128, 1>}]} {
    %c0 = arith.constant 0 : index
    %c0_0 = arith.constant 0 : index
    %0 = vector.load %arg1[%c0, %c0_0] : memref<128x16xf32, #tpu.memory_space<vmem>>, vector<128x16xf32>
    %c0_1 = arith.constant 0 : index
    %c0_2 = arith.constant 0 : index
    %1 = vector.load %arg2[%c0_1, %c0_2] : memref<16x128xf32, #tpu.memory_space<vmem>>, vector<16x128xf32>
    %cst = arith.constant dense<0.000000e+00> : vector<128x128xf32>
    %2 = tpu.matmul %0, %1, %cst {dimension_numbers = #tpu.dot_dimension_numbers<[1], [0], [0], [1], [0, 0, 1, 1], [], []>} : vector<128x16xf32>, vector<16x128xf32>, vector<128x128xf32> -> vector<128x128xf32>
    %c0_3 = arith.constant 0 : index
    %c0_4 = arith.constant 0 : index
    %3 = vector.load %arg5[%c0_3, %c0_4] : memref<128x128xf32, #tpu.memory_space<vmem>>, vector<128x128xf32>
    tpu.vector_store %arg5[%c0_3, %c0_4], %2 {strides = array<i32>} : memref<128x128xf32, #tpu.memory_space<vmem>>, vector<128x128xf32>,
    %c0_5 = arith.constant 0 : index
    %c0_6 = arith.constant 0 : index
    %4 = vector.load %arg3[%c0_5, %c0_6] : memref<1x128xf32, #tpu.memory_space<vmem>>, vector<1x128xf32>
    %5 = vector.broadcast %4 : vector<1x128xf32> to vector<128x128xf32>
    %6 = arith.mulf %2, %5 : vector<128x128xf32>
    %cst_7 = arith.constant dense<0.000000e+00> : vector<128xf32>
    %7 = vector.multi_reduction <add>, %6, %cst_7 [1] : vector<128x128xf32> to vector<128xf32>
    %8 = vector.shape_cast %7 : vector<128xf32> to vector<128x1xf32>
    %c0_8 = arith.constant 0 : index
    %c0_9 = arith.constant 0 : index
    %9 = vector.load %arg6[%c0_8, %c0_9] : memref<128x1xf32, #tpu.memory_space<vmem>>, vector<128x1xf32>
    tpu.vector_store %arg6[%c0_8, %c0_9], %8 {strides = array<i32>} : memref<128x1xf32, #tpu.memory_space<vmem>>, vector<128x1xf32>,
    %c0_10 = arith.constant 0 : index
    %c0_11 = arith.constant 0 : index
    %10 = vector.load %arg4[%c0_10, %c0_11] : memref<1x128xf32, #tpu.memory_space<vmem>>, vector<1x128xf32>
    %11 = vector.broadcast %10 : vector<1x128xf32> to vector<128x128xf32>
    %12 = arith.mulf %2, %11 : vector<128x128xf32>
    %cst_12 = arith.constant dense<0.000000e+00> : vector<128xf32>
    %13 = vector.multi_reduction <add>, %12, %cst_12 [1] : vector<128x128xf32> to vector<128xf32>
    %14 = vector.shape_cast %13 : vector<128xf32> to vector<128x1xf32>
    %c0_13 = arith.constant 0 : index
    %c0_14 = arith.constant 0 : index
    %15 = vector.load %arg7[%c0_13, %c0_14] : memref<128x1xf32, #tpu.memory_space<vmem>>, vector<128x1xf32>
    tpu.vector_store %arg7[%c0_13, %c0_14], %14 {strides = array<i32>} : memref<128x1xf32, #tpu.memory_space<vmem>>, vector<128x1xf32>,
    return
  }
  func.func @transform_0(%arg0: i32) -> (i32, i32) {
    %c0_i32 = arith.constant 0 : i32
    %c0_i32_0 = arith.constant 0 : i32
    return %arg0, %c0_i32 : i32, i32
  }
  func.func @transform_1(%arg0: i32) -> (i32, i32) {
    %c0_i32 = arith.constant 0 : i32
    %c0_i32_0 = arith.constant 0 : i32
    %c0_i32_1 = arith.constant 0 : i32
    return %c0_i32, %c0_i32_0 : i32, i32
  }
  func.func @transform_2(%arg0: i32) -> (i32, i32) {
    %c0_i32 = arith.constant 0 : i32
    %c0_i32_0 = arith.constant 0 : i32
    %c0_i32_1 = arith.constant 0 : i32
    return %c0_i32, %c0_i32_0 : i32, i32
  }
  func.func @transform_3(%arg0: i32) -> (i32, i32) {
    %c0_i32 = arith.constant 0 : i32
    %c0_i32_0 = arith.constant 0 : i32
    %c0_i32_1 = arith.constant 0 : i32
    return %c0_i32, %c0_i32_0 : i32, i32
  }
  func.func @transform_4(%arg0: i32) -> (i32, i32) {
    %c0_i32 = arith.constant 0 : i32
    %c0_i32_0 = arith.constant 0 : i32
    return %arg0, %c0_i32 : i32, i32
  }
  func.func @transform_5(%arg0: i32) -> (i32, i32) {
    %c0_i32 = arith.constant 0 : i32
    %c0_i32_0 = arith.constant 0 : i32
    return %arg0, %c0_i32 : i32, i32
  }
  func.func @transform_6(%arg0: i32) -> (i32, i32) {
    %c0_i32 = arith.constant 0 : i32
    %c0_i32_0 = arith.constant 0 : i32
    return %arg0, %c0_i32 : i32, i32
  }
}

</mosaic_0001>

<llo_original>
// kernel: tpu_custom_call.1
$region0: #{tpu_custom_call.1}
  #allocation0 [shape = 'u32[]', space=smem, size = 0x4, offset = 0x4, fixed_abs, tag = 'smem constant byte address 0x4 - core index']
  #allocation1 [shape = 'u32[72,128]{1,0:T(1,128)}', space=vmem, size = 0x9000, scoped, tag = 'internal scratch']
  %s0 = inlined_call_operand.vmem [shape: f32[256,16], index: 0, kind: input, shape index: {}]
  %s1 = inlined_call_operand.vmem [shape: f32[16,128], index: 1, kind: input, shape index: {}]
  %s2 = inlined_call_operand.vmem [shape: f32[1,128], index: 2, kind: input, shape index: {}]
  %s3 = inlined_call_operand.vmem [shape: f32[1,128], index: 3, kind: input, shape index: {}]
  %s4 = inlined_call_operand.hbm [shape: f32[256,128], index: 4, kind: output, shape index: {0}]
  %s5 = inlined_call_operand.vmem [shape: f32[256,1], index: 5, kind: output, shape index: {1}]
  %s6 = inlined_call_operand.vmem [shape: f32[256,1], index: 6, kind: output, shape index: {2}]
  %7 = xla_tuple %s4, %s5, %s6
  %s8 = sld [smem:[#allocation0]]
  $region65: #{tpu_custom_call.1} parent=0
    _
  %s10 = ssub.s32 1, %s8
  %s11 = scalar_select 0, %s10, %s8
  $region1: #{tpu_custom_call.1} parent=0
    #allocation2 [shape = 'u8[131072]{0}', space=vmem, size = 0x20000, scoped, tag = 'output window, operand 0']
    #allocation3 [shape = 's32[2]{0}', space=sflag, size = 0x8, scoped, tag = 'scoped memory for tpu_custom_call.1']
    %12 = vsyncpa [#allocation3], 0
    %s13 = scalar_lea.sflag [#allocation3], 1
    %14 = vsyncpa %s13, 0
    loop: start=0, step=1, limit=4
    $region2: #{tpu_custom_call.1} parent=1 // loop_pre_header
      _
    $region3: #{tpu_custom_call.1} parent=1 // loop_header
      %s16 = sphi 0, %s20
      %p17 = scmp.ge.s32.totalorder %s16, 4
      %s26 = sphi 0, %s28
      %s29 = sphi 0, %s26
      %s30 = sphi 0, %s29
      %s46 = sphi 0, %s30
      %s50 = sphi 0, %s50
      %s52 = sphi 0, %s50
      %s53 = sphi 0, %s52
      %s67 = sphi 0, %s53
      %s71 = sphi 0, %s71
      %s73 = sphi 0, %s71
      %s74 = sphi 0, %s73
      %s88 = sphi 0, %s74
      %s92 = sphi 0, %s92
      %s94 = sphi 0, %s92
      %s95 = sphi 0, %s94
      %s109 = sphi 0, %s95
      %s115 = sphi 0, %s117
      %s118 = sphi 0, %s115
      %s119 = sphi 0, %s118
      %s135 = sphi 0, %s119
      %s141 = sphi 0, %s143
      %s144 = sphi 0, %s141
      %s145 = sphi 0, %s144
      %s161 = sphi 0, %s145
      %s167 = sphi 0, %s169
      %s170 = sphi 0, %s167
      %s171 = sphi 0, %s170
      %s187 = sphi 0, %s171
    $region4: #{tpu_custom_call.1} parent=1 // loop_header_branch
      %19 = sbr.rel (%p17) target = $region8
    $region5: #{tpu_custom_call.1} parent=1 // loop_body
      %s21 = ssub.s32 %s16, 1
      %s22 = ssub.s32 %s16, 2
      %s23 = sadd.s32 %s16, 1
      %s24 = ssub.s32 %s16, %s23
      %p25 = scmp.eq.s32.totalorder %s24, 0
      %s27 = sadd.s32 %s26, 1
      %s28 = scalar_select %p25, %s26, %s27
      %p31 = pneg %p25
      %p32 = scmp.eq.s32.totalorder %s16, 1
      %p33 = por %p31, %p32
      %p34 = scmp.ne.s32.totalorder %s26, %s29
      %p35 = scmp.eq.s32.totalorder %s16, 0
      %p36 = por %p34, %p35
      %p37 = scmp.ne.s32.totalorder %s26, %s29
      %p38 = scmp.eq.s32.totalorder %s21, 1
      %p39 = por %p37, %p38
      %p40 = scmp.ne.s32.totalorder %s29, %s30
      %p41 = scmp.eq.s32.totalorder %s21, 0
      %p42 = por %p40, %p41
      %p43 = scmp.ne.s32.totalorder %s29, %s30
      %p44 = scmp.eq.s32.totalorder %s22, 1
      %p45 = por %p43, %p44
      %p47 = scmp.ne.s32.totalorder %s30, %s46
      %p48 = scmp.eq.s32.totalorder %s22, 0
      %p49 = por %p47, %p48
      %s51 = sadd.s32 %s50, 1
      %p54 = scmp.eq.s32.totalorder %s16, 1
      %p55 = scmp.ne.s32.totalorder %s50, %s52
      %p56 = scmp.eq.s32.totalorder %s16, 0
      %p57 = por %p55, %p56
      %p58 = scmp.ne.s32.totalorder %s50, %s52
      %p59 = scmp.eq.s32.totalorder %s21, 1
      %p60 = por %p58, %p59
      %p61 = scmp.ne.s32.totalorder %s52, %s53
      %p62 = scmp.eq.s32.totalorder %s21, 0
      %p63 = por %p61, %p62
      %p64 = scmp.ne.s32.totalorder %s52, %s53
      %p65 = scmp.eq.s32.totalorder %s22, 1
      %p66 = por %p64, %p65
      %p68 = scmp.ne.s32.totalorder %s53, %s67
      %p69 = scmp.eq.s32.totalorder %s22, 0
      %p70 = por %p68, %p69
      %s72 = sadd.s32 %s71, 1
      %p75 = scmp.eq.s32.totalorder %s16, 1
      %p76 = scmp.ne.s32.totalorder %s71, %s73
      %p77 = scmp.eq.s32.totalorder %s16, 0
      %p78 = por %p76, %p77
      %p79 = scmp.ne.s32.totalorder %s71, %s73
      %p80 = scmp.eq.s32.totalorder %s21, 1
      %p81 = por %p79, %p80
      %p82 = scmp.ne.s32.totalorder %s73, %s74
      %p83 = scmp.eq.s32.totalorder %s21, 0
      %p84 = por %p82, %p83
      %p85 = scmp.ne.s32.totalorder %s73, %s74
      %p86 = scmp.eq.s32.totalorder %s22, 1
      %p87 = por %p85, %p86
      %p89 = scmp.ne.s32.totalorder %s74, %s88
      %p90 = scmp.eq.s32.totalorder %s22, 0
      %p91 = por %p89, %p90
      %s93 = sadd.s32 %s92, 1
      %p96 = scmp.eq.s32.totalorder %s16, 1
      %p97 = scmp.ne.s32.totalorder %s92, %s94
      %p98 = scmp.eq.s32.totalorder %s16, 0
      %p99 = por %p97, %p98
      %p100 = scmp.ne.s32.totalorder %s92, %s94
      %p101 = scmp.eq.s32.totalorder %s21, 1
      %p102 = por %p100, %p101
      %p103 = scmp.ne.s32.totalorder %s94, %s95
      %p104 = scmp.eq.s32.totalorder %s21, 0
      %p105 = por %p103, %p104
      %p106 = scmp.ne.s32.totalorder %s94, %s95
      %p107 = scmp.eq.s32.totalorder %s22, 1
      %p108 = por %p106, %p107
      %p110 = scmp.ne.s32.totalorder %s95, %s109
      %p111 = scmp.eq.s32.totalorder %s22, 0
      %p112 = por %p110, %p111
      %s113 = ssub.s32 %s16, %s23
      %p114 = scmp.eq.s32.totalorder %s113, 0
      %s116 = sadd.s32 %s115, 1
      %s117 = scalar_select %p114, %s115, %s116
      %p120 = pneg %p114
      %p121 = scmp.eq.s32.totalorder %s16, 1
      %p122 = por %p120, %p121
      %p123 = scmp.ne.s32.totalorder %s115, %s118
      %p124 = scmp.eq.s32.totalorder %s16, 0
      %p125 = por %p123, %p124
      %p126 = scmp.ne.s32.totalorder %s115, %s118
      %p127 = scmp.eq.s32.totalorder %s21, 1
      %p128 = por %p126, %p127
      %p129 = scmp.ne.s32.totalorder %s118, %s119
      %p130 = scmp.eq.s32.totalorder %s21, 0
      %p131 = por %p129, %p130
      %p132 = scmp.ne.s32.totalorder %s118, %s119
      %p133 = scmp.eq.s32.totalorder %s22, 1
      %p134 = por %p132, %p133
      %p136 = scmp.ne.s32.totalorder %s119, %s135
      %p137 = scmp.eq.s32.totalorder %s22, 0
      %p138 = por %p136, %p137
      %s139 = ssub.s32 %s16, %s23
      %p140 = scmp.eq.s32.totalorder %s139, 0
      %s142 = sadd.s32 %s141, 1
      %s143 = scalar_select %p140, %s141, %s142
      %p146 = pneg %p140
      %p147 = scmp.eq.s32.totalorder %s16, 1
      %p148 = por %p146, %p147
      %p149 = scmp.ne.s32.totalorder %s141, %s144
      %p150 = scmp.eq.s32.totalorder %s16, 0
      %p151 = por %p149, %p150
      %p152 = scmp.ne.s32.totalorder %s141, %s144
      %p153 = scmp.eq.s32.totalorder %s21, 1
      %p154 = por %p152, %p153
      %p155 = scmp.ne.s32.totalorder %s144, %s145
      %p156 = scmp.eq.s32.totalorder %s21, 0
      %p157 = por %p155, %p156
      %p158 = scmp.ne.s32.totalorder %s144, %s145
      %p159 = scmp.eq.s32.totalorder %s22, 1
      %p160 = por %p158, %p159
      %p162 = scmp.ne.s32.totalorder %s145, %s161
      %p163 = scmp.eq.s32.totalorder %s22, 0
      %p164 = por %p162, %p163
      %s165 = ssub.s32 %s16, %s23
      %p166 = scmp.eq.s32.totalorder %s165, 0
      %s168 = sadd.s32 %s167, 1
      %s169 = scalar_select %p166, %s167, %s168
      %p172 = pneg %p166
      %p173 = scmp.eq.s32.totalorder %s16, 1
      %p174 = por %p172, %p173
      %p175 = scmp.ne.s32.totalorder %s167, %s170
      %p176 = scmp.eq.s32.totalorder %s16, 0
      %p177 = por %p175, %p176
      %p178 = scmp.ne.s32.totalorder %s167, %s170
      %p179 = scmp.eq.s32.totalorder %s21, 1
      %p180 = por %p178, %p179
      %p181 = scmp.ne.s32.totalorder %s170, %s171
      %p182 = scmp.eq.s32.totalorder %s21, 0
      %p183 = por %p181, %p182
      %p184 = scmp.ne.s32.totalorder %s170, %s171
      %p185 = scmp.eq.s32.totalorder %s22, 1
      %p186 = por %p184, %p185
      %p188 = scmp.ne.s32.totalorder %s171, %s187
      %p189 = scmp.eq.s32.totalorder %s22, 0
      %p190 = por %p188, %p189
      %p191 = scmp.le.s32.totalorder 1, %s16
      %p192 = scmp.lt.s32.totalorder %s16, 3
      %p193 = pnand %p191, %p192
      %p194 = pneg %p193
      // Predicated region
      $region9: #{tpu_custom_call.1} parent=5 // pred_check
        _
      $region10: #{tpu_custom_call.1} parent=5 // pred_check_branch
        %196 = sbr.rel (%p193) target = $region12
      $region11: #{tpu_custom_call.1} parent=5 // pred_region
        %s197 = ssub.s32 %s16, 1
        // Predicated region
        $region13: #{tpu_custom_call.1} parent=11 // pred_check
          %p198 = pneg %p63
        $region14: #{tpu_custom_call.1} parent=11 // pred_check_branch
          %200 = sbr.rel (%p198) target = $region16
        $region15: #{tpu_custom_call.1} parent=11 // pred_region
          _
        $region16: #{tpu_custom_call.1} parent=11 // pred_fallthru
          _
        // Predicated region
        $region17: #{tpu_custom_call.1} parent=11 // pred_check
          %p201 = pneg %p84
        $region18: #{tpu_custom_call.1} parent=11 // pred_check_branch
          %203 = sbr.rel (%p201) target = $region20
        $region19: #{tpu_custom_call.1} parent=11 // pred_region
          _
        $region20: #{tpu_custom_call.1} parent=11 // pred_fallthru
          _
        // Predicated region
        $region21: #{tpu_custom_call.1} parent=11 // pred_check
          %p204 = pneg %p105
        $region22: #{tpu_custom_call.1} parent=11 // pred_check_branch
          %206 = sbr.rel (%p204) target = $region24
        $region23: #{tpu_custom_call.1} parent=11 // pred_region
          _
        $region24: #{tpu_custom_call.1} parent=11 // pred_fallthru
          _
      $region12: #{tpu_custom_call.1} parent=5 // pred_fallthru
        _
      %p207 = scmp.lt.s32.totalorder %s16, 2
      // Predicated region
      $region25: #{tpu_custom_call.1} parent=5 // pred_check
        %p208 = pneg %p207
      $region26: #{tpu_custom_call.1} parent=5 // pred_check_branch
        %210 = sbr.rel (%p208) target = $region28
      $region27: #{tpu_custom_call.1} parent=5 // pred_region
        // Predicated region
        $region29: #{tpu_custom_call.1} parent=27 // pred_check
          %p211 = pneg %p36
        $region30: #{tpu_custom_call.1} parent=27 // pred_check_branch
          %213 = sbr.rel (%p211) target = $region32
        $region31: #{tpu_custom_call.1} parent=27 // pred_region
          %s214 = smul.u32 16, %s16
          %p215 = scmp.lt.s32.totalorder %s214, 31
          %s216 = scalar_select %p215, %s214, 31
          %s217 = smul.addr %s216, 8
          %s218 = scalar_lea.vmem %s0, %s217
          %s219 = smul.u32 16, %s16
        $region32: #{tpu_custom_call.1} parent=27 // pred_fallthru
          _
      $region28: #{tpu_custom_call.1} parent=5 // pred_fallthru
        _
      %p220 = scmp.le.s32.totalorder 1, %s16
      %p221 = scmp.lt.s32.totalorder %s16, 3
      %p222 = pnand %p220, %p221
      %p223 = pneg %p222
      // Predicated region
      $region33: #{tpu_custom_call.1} parent=5 // pred_check
        _
      $region34: #{tpu_custom_call.1} parent=5 // pred_check_branch
        %225 = sbr.rel (%p222) target = $region36
      $region35: #{tpu_custom_call.1} parent=5 // pred_region
        %s226 = ssub.s32 %s16, 1
        %s227 = smul.u32 16, %s21
        %p228 = scmp.lt.s32.totalorder %s227, 31
        %s229 = scalar_select %p228, %s227, 31
        %s230 = smul.addr %s229, 8
        %s231 = scalar_lea.vmem %s0, %s230
        %p232 = pneg %p42
        %p233 = pneg %p39
        %p234 = pneg %p63
        %p235 = pneg %p60
        %p236 = pneg %p84
        %p237 = pneg %p81
        %p238 = pneg %p105
        %p239 = pneg %p102
        %p240 = pneg %p131
        %p241 = pneg %p128
        %s242 = sand.u32 %s118, 1
        %s243 = scalar_lea.sflag [#allocation3], %s242
        %s244 = sand.u32 %s118, 1
        %s245 = smul.addr %s244, 128
        %s246 = scalar_lea.vmem [#allocation2], %s245
        %p247 = pneg %p157
        %p248 = pneg %p154
        %s249 = smul.u32 16, %s21
        %p250 = scmp.lt.s32.totalorder %s249, 31
        %s251 = scalar_select %p250, %s249, 31
        %s252 = smul.addr %s251, 8
        %s253 = scalar_lea.vmem %s5, %s252
        %p254 = pneg %p183
        %p255 = pneg %p180
        %s256 = smul.u32 16, %s21
        %p257 = scmp.lt.s32.totalorder %s256, 31
        %s258 = scalar_select %p257, %s256, 31
        %s259 = smul.addr %s258, 8
        %s260 = scalar_lea.vmem %s6, %s259
        %s261 = smul.u32 16, %s21
        %p262 = scmp.lt.s32.totalorder %s261, 31
        %s263 = scalar_select %p262, %s261, 31
        %s264 = smul.addr %s263, 8
        %s265 = scalar_lea.vmem %s0, %s264
        %s266 = smul.u32 16, %s21
        %s267 = smul.u32 16, %s21
        %s268 = smul.u32 16, %s21
        %p269 = scmp.lt.s32.totalorder %s268, 31
        %s270 = scalar_select %p269, %s268, 31
        %s271 = smul.addr %s270, 8
        %s272 = scalar_lea.vmem %s5, %s271
        %s273 = smul.u32 16, %s21
        %s274 = smul.u32 16, %s21
        %p275 = scmp.lt.s32.totalorder %s274, 31
        %s276 = scalar_select %p275, %s274, 31
        %s277 = smul.addr %s276, 8
        %s278 = scalar_lea.vmem %s6, %s277
        %s279 = smul.u32 16, %s21
        %v280 = vld [vmem:[%s265] sm:$0xff]
        %v281 = vld [vmem:[%s265 + $0x8] sm:$0xff]
        %v282 = vld [vmem:[%s265 + $0x10] sm:$0xff]
        %v283 = vld [vmem:[%s265 + $0x18] sm:$0xff]
        %v284 = vld [vmem:[%s265 + $0x20] sm:$0xff]
        %v285 = vld [vmem:[%s265 + $0x28] sm:$0xff]
        %v286 = vld [vmem:[%s265 + $0x30] sm:$0xff]
        %v287 = vld [vmem:[%s265 + $0x38] sm:$0xff]
        %v288 = vld [vmem:[%s265 + $0x40] sm:$0xff]
        %v289 = vld [vmem:[%s265 + $0x48] sm:$0xff]
        %v290 = vld [vmem:[%s265 + $0x50] sm:$0xff]
        %v291 = vld [vmem:[%s265 + $0x58] sm:$0xff]
        %v292 = vld [vmem:[%s265 + $0x60] sm:$0xff]
        %v293 = vld [vmem:[%s265 + $0x68] sm:$0xff]
        %v294 = vld [vmem:[%s265 + $0x70] sm:$0xff]
        %v295 = vld [vmem:[%s265 + $0x78] sm:$0xff]
        %v296 = vld [vmem:[%s1] sm:$0xff]
        %v297 = vld [vmem:[%s1 + $0x8] sm:$0xff]
        %vm298 = vcmask 130048
        %v300 = vsel %vm298, %v280, 0
        %v303 = vsel %vm298, %v281, 0
        %v306 = vsel %vm298, %v282, 0
        %v309 = vsel %vm298, %v283, 0
        %v312 = vsel %vm298, %v284, 0
        %v315 = vsel %vm298, %v285, 0
        %v318 = vsel %vm298, %v286, 0
        %v321 = vsel %vm298, %v287, 0
        %v324 = vsel %vm298, %v288, 0
        %v327 = vsel %vm298, %v289, 0
        %v330 = vsel %vm298, %v290, 0
        %v333 = vsel %vm298, %v291, 0
        %v336 = vsel %vm298, %v292, 0
        %v339 = vsel %vm298, %v293, 0
        %v342 = vsel %vm298, %v294, 0
        %v345 = vsel %vm298, %v295, 0
        %347 = vmatpush.msra.mxu0 0.0
        %348 = vmatpush.msra.mxu0 0.0
        %349 = vmatpush.msra.mxu0 0.0
        %350 = vmatpush.msra.mxu0 0.0
        %351 = vmatpush.msra.mxu0 0.0
        %352 = vmatpush.msra.mxu0 0.0
        %353 = vmatpush.msra.mxu0 0.0
        %354 = vmatpush.msra.mxu0 0.0
        %355 = vmatpush.msra.mxu0 0.0
        %356 = vmatpush.msra.mxu0 0.0
        %357 = vmatpush.msra.mxu0 0.0
        %358 = vmatpush.msra.mxu0 0.0
        %359 = vmatpush.msra.mxu0 0.0
        %360 = vmatpush.msra.mxu0 0.0
        %361 = vmatpush.msra.mxu0 %v297
        %362 = vmatpush.msra.mxu0 %v296
        %363 = vmatmul.f32.gmra.mxu0 %v300
        %v364 = vpop.f32.mrf.mxu0
        %v365 = vadd.f32 0.0, %v364
        %366 = vmatmul.f32.gmra.mxu0 %v303
        %v367 = vpop.f32.mrf.mxu0
        %v368 = vadd.f32 0.0, %v367
        %369 = vmatmul.f32.gmra.mxu0 %v306
        %v370 = vpop.f32.mrf.mxu0
        %v371 = vadd.f32 0.0, %v370
        %372 = vmatmul.f32.gmra.mxu0 %v309
        %v373 = vpop.f32.mrf.mxu0
        %v374 = vadd.f32 0.0, %v373
        %375 = vmatmul.f32.gmra.mxu0 %v312
        %v376 = vpop.f32.mrf.mxu0
        %v377 = vadd.f32 0.0, %v376
        %378 = vmatmul.f32.gmra.mxu0 %v315
        %v379 = vpop.f32.mrf.mxu0
        %v380 = vadd.f32 0.0, %v379
        %381 = vmatmul.f32.gmra.mxu0 %v318
        %v382 = vpop.f32.mrf.mxu0
        %v383 = vadd.f32 0.0, %v382
        %384 = vmatmul.f32.gmra.mxu0 %v321
        %v385 = vpop.f32.mrf.mxu0
        %v386 = vadd.f32 0.0, %v385
        %387 = vmatmul.f32.gmra.mxu0 %v324
        %v388 = vpop.f32.mrf.mxu0
        %v389 = vadd.f32 0.0, %v388
        %390 = vmatmul.f32.gmra.mxu0 %v327
        %v391 = vpop.f32.mrf.mxu0
        %v392 = vadd.f32 0.0, %v391
        %393 = vmatmul.f32.gmra.mxu0 %v330
        %v394 = vpop.f32.mrf.mxu0
        %v395 = vadd.f32 0.0, %v394
        %396 = vmatmul.f32.gmra.mxu0 %v333
        %v397 = vpop.f32.mrf.mxu0
        %v398 = vadd.f32 0.0, %v397
        %399 = vmatmul.f32.gmra.mxu0 %v336
        %v400 = vpop.f32.mrf.mxu0
        %v401 = vadd.f32 0.0, %v400
        %402 = vmatmul.f32.gmra.mxu0 %v339
        %v403 = vpop.f32.mrf.mxu0
        %v404 = vadd.f32 0.0, %v403
        %405 = vmatmul.f32.gmra.mxu0 %v342
        %v406 = vpop.f32.mrf.mxu0
        %v407 = vadd.f32 0.0, %v406
        %408 = vmatmul.f32.gmra.mxu0 %v345
        %v409 = vpop.f32.mrf.mxu0
        %v410 = vadd.f32 0.0, %v409
        %411 = vdwg.mxu0
        %412 = vst [vmem:[%s246] sm:$0xff] %v365
        %413 = vst [vmem:[%s246 + $0x8] sm:$0xff] %v368
        %414 = vst [vmem:[%s246 + $0x10] sm:$0xff] %v371
        %415 = vst [vmem:[%s246 + $0x18] sm:$0xff] %v374
        %416 = vst [vmem:[%s246 + $0x20] sm:$0xff] %v377
        %417 = vst [vmem:[%s246 + $0x28] sm:$0xff] %v380
        %418 = vst [vmem:[%s246 + $0x30] sm:$0xff] %v383
        %419 = vst [vmem:[%s246 + $0x38] sm:$0xff] %v386
        %420 = vst [vmem:[%s246 + $0x40] sm:$0xff] %v389
        %421 = vst [vmem:[%s246 + $0x48] sm:$0xff] %v392
        %422 = vst [vmem:[%s246 + $0x50] sm:$0xff] %v395
        %423 = vst [vmem:[%s246 + $0x58] sm:$0xff] %v398
        %424 = vst [vmem:[%s246 + $0x60] sm:$0xff] %v401
        %425 = vst [vmem:[%s246 + $0x68] sm:$0xff] %v404
        %426 = vst [vmem:[%s246 + $0x70] sm:$0xff] %v407
        %427 = vst [vmem:[%s246 + $0x78] sm:$0xff] %v410
        %v428 = vld [vmem:[%s2] sm:$0x1]
        %v430 = vperm.slane %v428, 0
        %v432 = vmul.f32 %v365, %v430
        %v433 = vmul.f32 %v368, %v430
        %v434 = vmul.f32 %v371, %v430
        %v435 = vmul.f32 %v374, %v430
        %v436 = vmul.f32 %v377, %v430
        %v437 = vmul.f32 %v380, %v430
        %v438 = vmul.f32 %v383, %v430
        %v439 = vmul.f32 %v386, %v430
        %v440 = vmul.f32 %v389, %v430
        %v441 = vmul.f32 %v392, %v430
        %v442 = vmul.f32 %v395, %v430
        %v443 = vmul.f32 %v398, %v430
        %v444 = vmul.f32 %v401, %v430
        %v445 = vmul.f32 %v404, %v430
        %v446 = vmul.f32 %v407, %v430
        %v447 = vmul.f32 %v410, %v430
        %448 = vadd.xlane.f32.xlu0 %v432
        %v449 = vpop.xlane.xlu0 %448
        %450 = vadd.xlane.f32.xlu0 %v433
        %v451 = vpop.xlane.xlu0 %450
        %452 = vadd.xlane.f32.xlu0 %v434
        %v453 = vpop.xlane.xlu0 %452
        %454 = vadd.xlane.f32.xlu0 %v435
        %v455 = vpop.xlane.xlu0 %454
        %456 = vadd.xlane.f32.xlu0 %v436
        %v457 = vpop.xlane.xlu0 %456
        %458 = vadd.xlane.f32.xlu0 %v437
        %v459 = vpop.xlane.xlu0 %458
        %460 = vadd.xlane.f32.xlu0 %v438
        %v461 = vpop.xlane.xlu0 %460
        %462 = vadd.xlane.f32.xlu0 %v439
        %v463 = vpop.xlane.xlu0 %462
        %464 = vadd.xlane.f32.xlu0 %v440
        %v465 = vpop.xlane.xlu0 %464
        %466 = vadd.xlane.f32.xlu0 %v441
        %v467 = vpop.xlane.xlu0 %466
        %468 = vadd.xlane.f32.xlu0 %v442
        %v469 = vpop.xlane.xlu0 %468
        %470 = vadd.xlane.f32.xlu0 %v443
        %v471 = vpop.xlane.xlu0 %470
        %472 = vadd.xlane.f32.xlu0 %v444
        %v473 = vpop.xlane.xlu0 %472
        %474 = vadd.xlane.f32.xlu0 %v445
        %v475 = vpop.xlane.xlu0 %474
        %476 = vadd.xlane.f32.xlu0 %v446
        %v477 = vpop.xlane.xlu0 %476
        %478 = vadd.xlane.f32.xlu0 %v447
        %v479 = vpop.xlane.xlu0 %478
        %vm480 = vcmask 7168
        %481 = vst.msk [vmem:[%s272] sm:$0xff] %vm480, %v449
        %482 = vst.msk [vmem:[%s272 + $0x8] sm:$0xff] %vm480, %v451
        %483 = vst.msk [vmem:[%s272 + $0x10] sm:$0xff] %vm480, %v453
        %484 = vst.msk [vmem:[%s272 + $0x18] sm:$0xff] %vm480, %v455
        %485 = vst.msk [vmem:[%s272 + $0x20] sm:$0xff] %vm480, %v457
        %486 = vst.msk [vmem:[%s272 + $0x28] sm:$0xff] %vm480, %v459
        %487 = vst.msk [vmem:[%s272 + $0x30] sm:$0xff] %vm480, %v461
        %488 = vst.msk [vmem:[%s272 + $0x38] sm:$0xff] %vm480, %v463
        %489 = vst.msk [vmem:[%s272 + $0x40] sm:$0xff] %vm480, %v465
        %490 = vst.msk [vmem:[%s272 + $0x48] sm:$0xff] %vm480, %v467
        %491 = vst.msk [vmem:[%s272 + $0x50] sm:$0xff] %vm480, %v469
        %492 = vst.msk [vmem:[%s272 + $0x58] sm:$0xff] %vm480, %v471
        %493 = vst.msk [vmem:[%s272 + $0x60] sm:$0xff] %vm480, %v473
        %494 = vst.msk [vmem:[%s272 + $0x68] sm:$0xff] %vm480, %v475
        %495 = vst.msk [vmem:[%s272 + $0x70] sm:$0xff] %vm480, %v477
        %496 = vst.msk [vmem:[%s272 + $0x78] sm:$0xff] %vm480, %v479
        %v497 = vld [vmem:[%s3] sm:$0x1]
        %v499 = vperm.slane %v497, 0
        %v501 = vmul.f32 %v365, %v499
        %v502 = vmul.f32 %v368, %v499
        %v503 = vmul.f32 %v371, %v499
        %v504 = vmul.f32 %v374, %v499
        %v505 = vmul.f32 %v377, %v499
        %v506 = vmul.f32 %v380, %v499
        %v507 = vmul.f32 %v383, %v499
        %v508 = vmul.f32 %v386, %v499
        %v509 = vmul.f32 %v389, %v499
        %v510 = vmul.f32 %v392, %v499
        %v511 = vmul.f32 %v395, %v499
        %v512 = vmul.f32 %v398, %v499
        %v513 = vmul.f32 %v401, %v499
        %v514 = vmul.f32 %v404, %v499
        %v515 = vmul.f32 %v407, %v499
        %v516 = vmul.f32 %v410, %v499
        %517 = vadd.xlane.f32.xlu0 %v501
        %v518 = vpop.xlane.xlu0 %517
        %519 = vadd.xlane.f32.xlu0 %v502
        %v520 = vpop.xlane.xlu0 %519
        %521 = vadd.xlane.f32.xlu0 %v503
        %v522 = vpop.xlane.xlu0 %521
        %523 = vadd.xlane.f32.xlu0 %v504
        %v524 = vpop.xlane.xlu0 %523
        %525 = vadd.xlane.f32.xlu0 %v505
        %v526 = vpop.xlane.xlu0 %525
        %527 = vadd.xlane.f32.xlu0 %v506
        %v528 = vpop.xlane.xlu0 %527
        %529 = vadd.xlane.f32.xlu0 %v507
        %v530 = vpop.xlane.xlu0 %529
        %531 = vadd.xlane.f32.xlu0 %v508
        %v532 = vpop.xlane.xlu0 %531
        %533 = vadd.xlane.f32.xlu0 %v509
        %v534 = vpop.xlane.xlu0 %533
        %535 = vadd.xlane.f32.xlu0 %v510
        %v536 = vpop.xlane.xlu0 %535
        %537 = vadd.xlane.f32.xlu0 %v511
        %v538 = vpop.xlane.xlu0 %537
        %539 = vadd.xlane.f32.xlu0 %v512
        %v540 = vpop.xlane.xlu0 %539
        %541 = vadd.xlane.f32.xlu0 %v513
        %v542 = vpop.xlane.xlu0 %541
        %543 = vadd.xlane.f32.xlu0 %v514
        %v544 = vpop.xlane.xlu0 %543
        %545 = vadd.xlane.f32.xlu0 %v515
        %v546 = vpop.xlane.xlu0 %545
        %547 = vadd.xlane.f32.xlu0 %v516
        %v548 = vpop.xlane.xlu0 %547
        %549 = vst.msk [vmem:[%s278] sm:$0xff] %vm480, %v518
        %550 = vst.msk [vmem:[%s278 + $0x8] sm:$0xff] %vm480, %v520
        %551 = vst.msk [vmem:[%s278 + $0x10] sm:$0xff] %vm480, %v522
        %552 = vst.msk [vmem:[%s278 + $0x18] sm:$0xff] %vm480, %v524
        %553 = vst.msk [vmem:[%s278 + $0x20] sm:$0xff] %vm480, %v526
        %554 = vst.msk [vmem:[%s278 + $0x28] sm:$0xff] %vm480, %v528
        %555 = vst.msk [vmem:[%s278 + $0x30] sm:$0xff] %vm480, %v530
        %556 = vst.msk [vmem:[%s278 + $0x38] sm:$0xff] %vm480, %v532
        %557 = vst.msk [vmem:[%s278 + $0x40] sm:$0xff] %vm480, %v534
        %558 = vst.msk [vmem:[%s278 + $0x48] sm:$0xff] %vm480, %v536
        %559 = vst.msk [vmem:[%s278 + $0x50] sm:$0xff] %vm480, %v538
        %560 = vst.msk [vmem:[%s278 + $0x58] sm:$0xff] %vm480, %v540
        %561 = vst.msk [vmem:[%s278 + $0x60] sm:$0xff] %vm480, %v542
        %562 = vst.msk [vmem:[%s278 + $0x68] sm:$0xff] %vm480, %v544
        %563 = vst.msk [vmem:[%s278 + $0x70] sm:$0xff] %vm480, %v546
        %564 = vst.msk [vmem:[%s278 + $0x78] sm:$0xff] %vm480, %v548
        %s565 = sand.u32 %s118, 1
        %s566 = scalar_lea.sflag [#allocation3], %s565
        %s567 = sand.u32 %s118, 1
        %s568 = smul.addr %s567, 128
        %s569 = scalar_lea.vmem [#allocation2], %s568
        %s570 = smul.u32 16, %s21
        %p571 = scmp.lt.s32.totalorder %s570, 31
        %s572 = scalar_select %p571, %s570, 31
        %s573 = smul.addr %s572, 8
        %s574 = scalar_lea.vmem %s5, %s573
        %s575 = smul.u32 16, %s21
        %p576 = scmp.lt.s32.totalorder %s575, 31
        %s577 = scalar_select %p576, %s575, 31
        %s578 = smul.addr %s577, 8
        %s579 = scalar_lea.vmem %s6, %s578
        // Predicated region
        $region37: #{tpu_custom_call.1} parent=35 // pred_check
          %p580 = pneg %p128
        $region38: #{tpu_custom_call.1} parent=35 // pred_check_branch
          %582 = sbr.rel (%p580) target = $region40
        $region39: #{tpu_custom_call.1} parent=35 // pred_region
          %s583 = smul.u32 16, %s21
          %585 = vsyncadd %s566, 0
          %s586 = smul.addr %s583, 8
          %s587 = scalar_lea.hbm %s4, %s586
          %s588 = sshll.u32 %s569, 4
          %s589 = int_to_ptr.vmem [resolvable:$true] %s588
          %s590 = sshll.u32 %s587, 4
          %s591 = int_to_ptr.hbm [resolvable:$true] %s590
          %596 = dma.vmem_to_hbm [thread:$0]  %s589, 2048, %s591, %s566, 128, 128, 8
        $region40: #{tpu_custom_call.1} parent=35 // pred_fallthru
          _
        // Predicated region
        $region41: #{tpu_custom_call.1} parent=35 // pred_check
          %p597 = pneg %p154
        $region42: #{tpu_custom_call.1} parent=35 // pred_check_branch
          %599 = sbr.rel (%p597) target = $region44
        $region43: #{tpu_custom_call.1} parent=35 // pred_region
          %s600 = smul.u32 16, %s21
        $region44: #{tpu_custom_call.1} parent=35 // pred_fallthru
          _
        // Predicated region
        $region45: #{tpu_custom_call.1} parent=35 // pred_check
          %p601 = pneg %p180
        $region46: #{tpu_custom_call.1} parent=35 // pred_check_branch
          %603 = sbr.rel (%p601) target = $region48
        $region47: #{tpu_custom_call.1} parent=35 // pred_region
          %s604 = smul.u32 16, %s21
        $region48: #{tpu_custom_call.1} parent=35 // pred_fallthru
          _
      $region36: #{tpu_custom_call.1} parent=5 // pred_fallthru
        _
      %p605 = scmp.le.s32.totalorder 2, %s16
      // Predicated region
      $region49: #{tpu_custom_call.1} parent=5 // pred_check
        %p606 = pneg %p605
      $region50: #{tpu_custom_call.1} parent=5 // pred_check_branch
        %608 = sbr.rel (%p606) target = $region52
      $region51: #{tpu_custom_call.1} parent=5 // pred_region
        %s609 = ssub.s32 %s16, 2
        // Predicated region
        $region53: #{tpu_custom_call.1} parent=51 // pred_check
          %p610 = pneg %p134
        $region54: #{tpu_custom_call.1} parent=51 // pred_check_branch
          %612 = sbr.rel (%p610) target = $region56
        $region55: #{tpu_custom_call.1} parent=51 // pred_region
          %s613 = sand.u32 %s119, 1
          %s614 = scalar_lea.sflag [#allocation3], %s613
          %s615 = sand.u32 %s119, 1
          %s616 = smul.addr %s615, 128
          %s617 = scalar_lea.vmem [#allocation2], %s616
          %619 = dma.done %s614, 2048
        $region56: #{tpu_custom_call.1} parent=51 // pred_fallthru
          _
        // Predicated region
        $region57: #{tpu_custom_call.1} parent=51 // pred_check
          %p620 = pneg %p160
        $region58: #{tpu_custom_call.1} parent=51 // pred_check_branch
          %622 = sbr.rel (%p620) target = $region60
        $region59: #{tpu_custom_call.1} parent=51 // pred_region
          %s623 = smul.u32 16, %s22
          %p624 = scmp.lt.s32.totalorder %s623, 31
          %s625 = scalar_select %p624, %s623, 31
          %s626 = smul.addr %s625, 8
          %s627 = scalar_lea.vmem %s5, %s626
        $region60: #{tpu_custom_call.1} parent=51 // pred_fallthru
          _
        // Predicated region
        $region61: #{tpu_custom_call.1} parent=51 // pred_check
          %p628 = pneg %p186
        $region62: #{tpu_custom_call.1} parent=51 // pred_check_branch
          %630 = sbr.rel (%p628) target = $region64
        $region63: #{tpu_custom_call.1} parent=51 // pred_region
          %s631 = smul.u32 16, %s22
          %p632 = scmp.lt.s32.totalorder %s631, 31
          %s633 = scalar_select %p632, %s631, 31
          %s634 = smul.addr %s633, 8
          %s635 = scalar_lea.vmem %s6, %s634
        $region64: #{tpu_custom_call.1} parent=51 // pred_fallthru
          _
      $region52: #{tpu_custom_call.1} parent=5 // pred_fallthru
        _
    $region6: #{tpu_custom_call.1} parent=1 // loop_footer
      %s20 = sadd.s32 1, %s16
    $region7: #{tpu_custom_call.1} parent=1 // loop_footer_branch
      %15 = sbr.rel target = $region3
    $region8: #{tpu_custom_call.1} parent=1 // loop_exit
      _
    %636 = vsyncpa [#allocation3], 1
    %s637 = scalar_lea.sflag [#allocation3], 1
    %638 = vsyncpa %s637, 1

// kernel: tpu_custom_call.1
$region0: #{tpu_custom_call.1}
  #allocation0 [shape = 'u32[]', space=smem, size = 0x4, offset = 0x4, fixed_abs, tag = 'smem constant byte address 0x4 - core index']
  #allocation1 [shape = 'u32[72,128]{1,0:T(1,128)}', space=vmem, size = 0x9000, scoped, tag = 'internal scratch']
  %s0 = inlined_call_operand.vmem [shape: f32[256,16], index: 0, kind: input, shape index: {}]
  %s1 = inlined_call_operand.vmem [shape: f32[16,128], index: 1, kind: input, shape index: {}]
  %s2 = inlined_call_operand.vmem [shape: f32[1,128], index: 2, kind: input, shape index: {}]
  %s3 = inlined_call_operand.vmem [shape: f32[1,128], index: 3, kind: input, shape index: {}]
  %s4 = inlined_call_operand.hbm [shape: f32[256,128], index: 4, kind: output, shape index: {0}]
  %s5 = inlined_call_operand.vmem [shape: f32[256,1], index: 5, kind: output, shape index: {1}]
  %s6 = inlined_call_operand.vmem [shape: f32[256,1], index: 6, kind: output, shape index: {2}]
  %7 = xla_tuple %s4, %s5, %s6
  %s8 = sld [smem:[#allocation0]]
  $region65: #{tpu_custom_call.1} parent=0
    _
  %s10 = ssub.s32 1, %s8
  %s11 = scalar_select 0, %s10, %s8
  $region1: #{tpu_custom_call.1} parent=0
    #allocation2 [shape = 'u8[131072]{0}', space=vmem, size = 0x20000, scoped, tag = 'output window, operand 0']
    #allocation3 [shape = 's32[2]{0}', space=sflag, size = 0x8, scoped, tag = 'scoped memory for tpu_custom_call.1']
    %12 = vsyncpa [#allocation3], 0
    %s13 = scalar_lea.sflag [#allocation3], 1
    %14 = vsyncpa %s13, 0
    loop: start=0, step=1, limit=4
    $region2: #{tpu_custom_call.1} parent=1 // loop_pre_header
      _
    $region3: #{tpu_custom_call.1} parent=1 // loop_header
      %s16 = sphi 0, %s20
      %p17 = scmp.ge.s32.totalorder %s16, 4
      %s26 = sphi 0, %s28
      %s29 = sphi 0, %s26
      %s30 = sphi 0, %s29
      %s46 = sphi 0, %s30
      %s50 = sphi 0, %s50
      %s52 = sphi 0, %s50
      %s53 = sphi 0, %s52
      %s67 = sphi 0, %s53
      %s71 = sphi 0, %s71
      %s73 = sphi 0, %s71
      %s74 = sphi 0, %s73
      %s88 = sphi 0, %s74
      %s92 = sphi 0, %s92
      %s94 = sphi 0, %s92
      %s95 = sphi 0, %s94
      %s109 = sphi 0, %s95
      %s115 = sphi 0, %s117
      %s118 = sphi 0, %s115
      %s119 = sphi 0, %s118
      %s135 = sphi 0, %s119
      %s141 = sphi 0, %s143
      %s144 = sphi 0, %s141
      %s145 = sphi 0, %s144
      %s161 = sphi 0, %s145
      %s167 = sphi 0, %s169
      %s170 = sphi 0, %s167
      %s171 = sphi 0, %s170
      %s187 = sphi 0, %s171
    $region4: #{tpu_custom_call.1} parent=1 // loop_header_branch
      %19 = sbr.rel (%p17) target = $region8
    $region5: #{tpu_custom_call.1} parent=1 // loop_body
      %s21 = ssub.s32 %s16, 1
      %s22 = ssub.s32 %s16, 2
      %s23 = sadd.s32 %s16, 1
      %s24 = ssub.s32 %s16, %s23
      %p25 = scmp.eq.s32.totalorder %s24, 0
      %s27 = sadd.s32 %s26, 1
      %s28 = scalar_select %p25, %s26, %s27
      %p31 = pneg %p25
      %p32 = scmp.eq.s32.totalorder %s16, 1
      %p33 = por %p31, %p32
      %p34 = scmp.ne.s32.totalorder %s26, %s29
      %p35 = scmp.eq.s32.totalorder %s16, 0
      %p36 = por %p34, %p35
      %p37 = scmp.ne.s32.totalorder %s26, %s29
      %p38 = scmp.eq.s32.totalorder %s21, 1
      %p39 = por %p37, %p38
      %p40 = scmp.ne.s32.totalorder %s29, %s30
      %p41 = scmp.eq.s32.totalorder %s21, 0
      %p42 = por %p40, %p41
      %p43 = scmp.ne.s32.totalorder %s29, %s30
      %p44 = scmp.eq.s32.totalorder %s22, 1
      %p45 = por %p43, %p44
      %p47 = scmp.ne.s32.totalorder %s30, %s46
      %p48 = scmp.eq.s32.totalorder %s22, 0
      %p49 = por %p47, %p48
      %s51 = sadd.s32 %s50, 1
      %p54 = scmp.eq.s32.totalorder %s16, 1
      %p55 = scmp.ne.s32.totalorder %s50, %s52
      %p56 = scmp.eq.s32.totalorder %s16, 0
      %p57 = por %p55, %p56
      %p58 = scmp.ne.s32.totalorder %s50, %s52
      %p59 = scmp.eq.s32.totalorder %s21, 1
      %p60 = por %p58, %p59
      %p61 = scmp.ne.s32.totalorder %s52, %s53
      %p62 = scmp.eq.s32.totalorder %s21, 0
      %p63 = por %p61, %p62
      %p64 = scmp.ne.s32.totalorder %s52, %s53
      %p65 = scmp.eq.s32.totalorder %s22, 1
      %p66 = por %p64, %p65
      %p68 = scmp.ne.s32.totalorder %s53, %s67
      %p69 = scmp.eq.s32.totalorder %s22, 0
      %p70 = por %p68, %p69
      %s72 = sadd.s32 %s71, 1
      %p75 = scmp.eq.s32.totalorder %s16, 1
      %p76 = scmp.ne.s32.totalorder %s71, %s73
      %p77 = scmp.eq.s32.totalorder %s16, 0
      %p78 = por %p76, %p77
      %p79 = scmp.ne.s32.totalorder %s71, %s73
      %p80 = scmp.eq.s32.totalorder %s21, 1
      %p81 = por %p79, %p80
      %p82 = scmp.ne.s32.totalorder %s73, %s74
      %p83 = scmp.eq.s32.totalorder %s21, 0
      %p84 = por %p82, %p83
      %p85 = scmp.ne.s32.totalorder %s73, %s74
      %p86 = scmp.eq.s32.totalorder %s22, 1
      %p87 = por %p85, %p86
      %p89 = scmp.ne.s32.totalorder %s74, %s88
      %p90 = scmp.eq.s32.totalorder %s22, 0
      %p91 = por %p89, %p90
      %s93 = sadd.s32 %s92, 1
      %p96 = scmp.eq.s32.totalorder %s16, 1
      %p97 = scmp.ne.s32.totalorder %s92, %s94
      %p98 = scmp.eq.s32.totalorder %s16, 0
      %p99 = por %p97, %p98
      %p100 = scmp.ne.s32.totalorder %s92, %s94
      %p101 = scmp.eq.s32.totalorder %s21, 1
      %p102 = por %p100, %p101
      %p103 = scmp.ne.s32.totalorder %s94, %s95
      %p104 = scmp.eq.s32.totalorder %s21, 0
      %p105 = por %p103, %p104
      %p106 = scmp.ne.s32.totalorder %s94, %s95
      %p107 = scmp.eq.s32.totalorder %s22, 1
      %p108 = por %p106, %p107
      %p110 = scmp.ne.s32.totalorder %s95, %s109
      %p111 = scmp.eq.s32.totalorder %s22, 0
      %p112 = por %p110, %p111
      %s113 = ssub.s32 %s16, %s23
      %p114 = scmp.eq.s32.totalorder %s113, 0
      %s116 = sadd.s32 %s115, 1
      %s117 = scalar_select %p114, %s115, %s116
      %p120 = pneg %p114
      %p121 = scmp.eq.s32.totalorder %s16, 1
      %p122 = por %p120, %p121
      %p123 = scmp.ne.s32.totalorder %s115, %s118
      %p124 = scmp.eq.s32.totalorder %s16, 0
      %p125 = por %p123, %p124
      %p126 = scmp.ne.s32.totalorder %s115, %s118
      %p127 = scmp.eq.s32.totalorder %s21, 1
      %p128 = por %p126, %p127
      %p129 = scmp.ne.s32.totalorder %s118, %s119
      %p130 = scmp.eq.s32.totalorder %s21, 0
      %p131 = por %p129, %p130
      %p132 = scmp.ne.s32.totalorder %s118, %s119
      %p133 = scmp.eq.s32.totalorder %s22, 1
      %p134 = por %p132, %p133
      %p136 = scmp.ne.s32.totalorder %s119, %s135
      %p137 = scmp.eq.s32.totalorder %s22, 0
      %p138 = por %p136, %p137
      %s139 = ssub.s32 %s16, %s23
      %p140 = scmp.eq.s32.totalorder %s139, 0
      %s142 = sadd.s32 %s141, 1
      %s143 = scalar_select %p140, %s141, %s142
      %p146 = pneg %p140
      %p147 = scmp.eq.s32.totalorder %s16, 1
      %p148 = por %p146, %p147
      %p149 = scmp.ne.s32.totalorder %s141, %s144
      %p150 = scmp.eq.s32.totalorder %s16, 0
      %p151 = por %p149, %p150
      %p152 = scmp.ne.s32.totalorder %s141, %s144
      %p153 = scmp.eq.s32.totalorder %s21, 1
      %p154 = por %p152, %p153
      %p155 = scmp.ne.s32.totalorder %s144, %s145
      %p156 = scmp.eq.s32.totalorder %s21, 0
      %p157 = por %p155, %p156
      %p158 = scmp.ne.s32.totalorder %s144, %s145
      %p159 = scmp.eq.s32.totalorder %s22, 1
      %p160 = por %p158, %p159
      %p162 = scmp.ne.s32.totalorder %s145, %s161
      %p163 = scmp.eq.s32.totalorder %s22, 0
      %p164 = por %p162, %p163
      %s165 = ssub.s32 %s16, %s23
      %p166 = scmp.eq.s32.totalorder %s165, 0
      %s168 = sadd.s32 %s167, 1
      %s169 = scalar_select %p166, %s167, %s168
      %p172 = pneg %p166
      %p173 = scmp.eq.s32.totalorder %s16, 1
      %p174 = por %p172, %p173
      %p175 = scmp.ne.s32.totalorder %s167, %s170
      %p176 = scmp.eq.s32.totalorder %s16, 0
      %p177 = por %p175, %p176
      %p178 = scmp.ne.s32.totalorder %s167, %s170
      %p179 = scmp.eq.s32.totalorder %s21, 1
      %p180 = por %p178, %p179
      %p181 = scmp.ne.s32.totalorder %s170, %s171
      %p182 = scmp.eq.s32.totalorder %s21, 0
      %p183 = por %p181, %p182
      %p184 = scmp.ne.s32.totalorder %s170, %s171
      %p185 = scmp.eq.s32.totalorder %s22, 1
      %p186 = por %p184, %p185
      %p188 = scmp.ne.s32.totalorder %s171, %s187
      %p189 = scmp.eq.s32.totalorder %s22, 0
      %p190 = por %p188, %p189
      %p191 = scmp.le.s32.totalorder 1, %s16
      %p192 = scmp.lt.s32.totalorder %s16, 3
      %p193 = pnand %p191, %p192
      %p194 = pneg %p193
      // Predicated region
      $region9: #{tpu_custom_call.1} parent=5 // pred_check
        _
      $region10: #{tpu_custom_call.1} parent=5 // pred_check_branch
        %196 = sbr.rel (%p193) target = $region12
      $region11: #{tpu_custom_call.1} parent=5 // pred_region
        %s197 = ssub.s32 %s16, 1
        // Predicated region
        $region13: #{tpu_custom_call.1} parent=11 // pred_check
          %p198 = pneg %p63
        $region14: #{tpu_custom_call.1} parent=11 // pred_check_branch
          %200 = sbr.rel (%p198) target = $region16
        $region15: #{tpu_custom_call.1} parent=11 // pred_region
          _
        $region16: #{tpu_custom_call.1} parent=11 // pred_fallthru
          _
        // Predicated region
        $region17: #{tpu_custom_call.1} parent=11 // pred_check
          %p201 = pneg %p84
        $region18: #{tpu_custom_call.1} parent=11 // pred_check_branch
          %203 = sbr.rel (%p201) target = $region20
        $region19: #{tpu_custom_call.1} parent=11 // pred_region
          _
        $region20: #{tpu_custom_call.1} parent=11 // pred_fallthru
          _
        // Predicated region
        $region21: #{tpu_custom_call.1} parent=11 // pred_check
          %p204 = pneg %p105
        $region22: #{tpu_custom_call.1} parent=11 // pred_check_branch
          %206 = sbr.rel (%p204) target = $region24
        $region23: #{tpu_custom_call.1} parent=11 // pred_region
          _
        $region24: #{tpu_custom_call.1} parent=11 // pred_fallthru
          _
      $region12: #{tpu_custom_call.1} parent=5 // pred_fallthru
        _
      %p207 = scmp.lt.s32.totalorder %s16, 2
      // Predicated region
      $region25: #{tpu_custom_call.1} parent=5 // pred_check
        %p208 = pneg %p207
      $region26: #{tpu_custom_call.1} parent=5 // pred_check_branch
        %210 = sbr.rel (%p208) target = $region28
      $region27: #{tpu_custom_call.1} parent=5 // pred_region
        // Predicated region
        $region29: #{tpu_custom_call.1} parent=27 // pred_check
          %p211 = pneg %p36
        $region30: #{tpu_custom_call.1} parent=27 // pred_check_branch
          %213 = sbr.rel (%p211) target = $region32
        $region31: #{tpu_custom_call.1} parent=27 // pred_region
          %s214 = smul.u32 16, %s16
          %p215 = scmp.lt.s32.totalorder %s214, 31
          %s216 = scalar_select %p215, %s214, 31
          %s217 = smul.addr %s216, 8
          %s218 = scalar_lea.vmem %s0, %s217
          %s219 = smul.u32 16, %s16
        $region32: #{tpu_custom_call.1} parent=27 // pred_fallthru
          _
      $region28: #{tpu_custom_call.1} parent=5 // pred_fallthru
        _
      %p220 = scmp.le.s32.totalorder 1, %s16
      %p221 = scmp.lt.s32.totalorder %s16, 3
      %p222 = pnand %p220, %p221
      %p223 = pneg %p222
      // Predicated region
      $region33: #{tpu_custom_call.1} parent=5 // pred_check
        _
      $region34: #{tpu_custom_call.1} parent=5 // pred_check_branch
        %225 = sbr.rel (%p222) target = $region36
      $region35: #{tpu_custom_call.1} parent=5 // pred_region
        %s226 = ssub.s32 %s16, 1
        %s227 = smul.u32 16, %s21
        %p228 = scmp.lt.s32.totalorder %s227, 31
        %s229 = scalar_select %p228, %s227, 31
        %s230 = smul.addr %s229, 8
        %s231 = scalar_lea.vmem %s0, %s230
        %p232 = pneg %p42
        %p233 = pneg %p39
        %p234 = pneg %p63
        %p235 = pneg %p60
        %p236 = pneg %p84
        %p237 = pneg %p81
        %p238 = pneg %p105
        %p239 = pneg %p102
        %p240 = pneg %p131
        %p241 = pneg %p128
        %s242 = sand.u32 %s118, 1
        %s243 = scalar_lea.sflag [#allocation3], %s242
        %s244 = sand.u32 %s118, 1
        %s245 = smul.addr %s244, 128
        %s246 = scalar_lea.vmem [#allocation2], %s245
        %p247 = pneg %p157
        %p248 = pneg %p154
        %s249 = smul.u32 16, %s21
        %p250 = scmp.lt.s32.totalorder %s249, 31
        %s251 = scalar_select %p250, %s249, 31
        %s252 = smul.addr %s251, 8
        %s253 = scalar_lea.vmem %s5, %s252
        %p254 = pneg %p183
        %p255 = pneg %p180
        %s256 = smul.u32 16, %s21
        %p257 = scmp.lt.s32.totalorder %s256, 31
        %s258 = scalar_select %p257, %s256, 31
        %s259 = smul.addr %s258, 8
        %s260 = scalar_lea.vmem %s6, %s259
        %s261 = smul.u32 16, %s21
        %p262 = scmp.lt.s32.totalorder %s261, 31
        %s263 = scalar_select %p262, %s261, 31
        %s264 = smul.addr %s263, 8
        %s265 = scalar_lea.vmem %s0, %s264
        %s266 = smul.u32 16, %s21
        %s267 = smul.u32 16, %s21
        %s268 = smul.u32 16, %s21
        %p269 = scmp.lt.s32.totalorder %s268, 31
        %s270 = scalar_select %p269, %s268, 31
        %s271 = smul.addr %s270, 8
        %s272 = scalar_lea.vmem %s5, %s271
        %s273 = smul.u32 16, %s21
        %s274 = smul.u32 16, %s21
        %p275 = scmp.lt.s32.totalorder %s274, 31
        %s276 = scalar_select %p275, %s274, 31
        %s277 = smul.addr %s276, 8
        %s278 = scalar_lea.vmem %s6, %s277
        %s279 = smul.u32 16, %s21
        %v280 = vld [vmem:[%s265] sm:$0xff]
        %v281 = vld [vmem:[%s265 + $0x8] sm:$0xff]
        %v282 = vld [vmem:[%s265 + $0x10] sm:$0xff]
        %v283 = vld [vmem:[%s265 + $0x18] sm:$0xff]
        %v284 = vld [vmem:[%s265 + $0x20] sm:$0xff]
        %v285 = vld [vmem:[%s265 + $0x28] sm:$0xff]
        %v286 = vld [vmem:[%s265 + $0x30] sm:$0xff]
        %v287 = vld [vmem:[%s265 + $0x38] sm:$0xff]
        %v288 = vld [vmem:[%s265 + $0x40] sm:$0xff]
        %v289 = vld [vmem:[%s265 + $0x48] sm:$0xff]
        %v290 = vld [vmem:[%s265 + $0x50] sm:$0xff]
        %v291 = vld [vmem:[%s265 + $0x58] sm:$0xff]
        %v292 = vld [vmem:[%s265 + $0x60] sm:$0xff]
        %v293 = vld [vmem:[%s265 + $0x68] sm:$0xff]
        %v294 = vld [vmem:[%s265 + $0x70] sm:$0xff]
        %v295 = vld [vmem:[%s265 + $0x78] sm:$0xff]
        %v296 = vld [vmem:[%s1] sm:$0xff]
        %v297 = vld [vmem:[%s1 + $0x8] sm:$0xff]
        %vm298 = vcmask 130048
        %v300 = vsel %vm298, %v280, 0
        %v303 = vsel %vm298, %v281, 0
        %v306 = vsel %vm298, %v282, 0
        %v309 = vsel %vm298, %v283, 0
        %v312 = vsel %vm298, %v284, 0
        %v315 = vsel %vm298, %v285, 0
        %v318 = vsel %vm298, %v286, 0
        %v321 = vsel %vm298, %v287, 0
        %v324 = vsel %vm298, %v288, 0
        %v327 = vsel %vm298, %v289, 0
        %v330 = vsel %vm298, %v290, 0
        %v333 = vsel %vm298, %v291, 0
        %v336 = vsel %vm298, %v292, 0
        %v339 = vsel %vm298, %v293, 0
        %v342 = vsel %vm298, %v294, 0
        %v345 = vsel %vm298, %v295, 0
        %347 = vmatpush.msra.mxu0 0.0
        %348 = vmatpush.msra.mxu0 0.0
        %349 = vmatpush.msra.mxu0 0.0
        %350 = vmatpush.msra.mxu0 0.0
        %351 = vmatpush.msra.mxu0 0.0
        %352 = vmatpush.msra.mxu0 0.0
        %353 = vmatpush.msra.mxu0 0.0
        %354 = vmatpush.msra.mxu0 0.0
        %355 = vmatpush.msra.mxu0 0.0
        %356 = vmatpush.msra.mxu0 0.0
        %357 = vmatpush.msra.mxu0 0.0
        %358 = vmatpush.msra.mxu0 0.0
        %359 = vmatpush.msra.mxu0 0.0
        %360 = vmatpush.msra.mxu0 0.0
        %361 = vmatpush.msra.mxu0 %v297
        %362 = vmatpush.msra.mxu0 %v296
        %363 = vmatmul.f32.gmra.mxu0 %v300
        %v364 = vpop.f32.mrf.mxu0
        %v365 = vadd.f32 0.0, %v364
        %366 = vmatmul.f32.gmra.mxu0 %v303
        %v367 = vpop.f32.mrf.mxu0
        %v368 = vadd.f32 0.0, %v367
        %369 = vmatmul.f32.gmra.mxu0 %v306
        %v370 = vpop.f32.mrf.mxu0
        %v371 = vadd.f32 0.0, %v370
        %372 = vmatmul.f32.gmra.mxu0 %v309
        %v373 = vpop.f32.mrf.mxu0
        %v374 = vadd.f32 0.0, %v373
        %375 = vmatmul.f32.gmra.mxu0 %v312
        %v376 = vpop.f32.mrf.mxu0
        %v377 = vadd.f32 0.0, %v376
        %378 = vmatmul.f32.gmra.mxu0 %v315
        %v379 = vpop.f32.mrf.mxu0
        %v380 = vadd.f32 0.0, %v379
        %381 = vmatmul.f32.gmra.mxu0 %v318
        %v382 = vpop.f32.mrf.mxu0
        %v383 = vadd.f32 0.0, %v382
        %384 = vmatmul.f32.gmra.mxu0 %v321
        %v385 = vpop.f32.mrf.mxu0
        %v386 = vadd.f32 0.0, %v385
        %387 = vmatmul.f32.gmra.mxu0 %v324
        %v388 = vpop.f32.mrf.mxu0
        %v389 = vadd.f32 0.0, %v388
        %390 = vmatmul.f32.gmra.mxu0 %v327
        %v391 = vpop.f32.mrf.mxu0
        %v392 = vadd.f32 0.0, %v391
        %393 = vmatmul.f32.gmra.mxu0 %v330
        %v394 = vpop.f32.mrf.mxu0
        %v395 = vadd.f32 0.0, %v394
        %396 = vmatmul.f32.gmra.mxu0 %v333
        %v397 = vpop.f32.mrf.mxu0
        %v398 = vadd.f32 0.0, %v397
        %399 = vmatmul.f32.gmra.mxu0 %v336
        %v400 = vpop.f32.mrf.mxu0
        %v401 = vadd.f32 0.0, %v400
        %402 = vmatmul.f32.gmra.mxu0 %v339
        %v403 = vpop.f32.mrf.mxu0
        %v404 = vadd.f32 0.0, %v403
        %405 = vmatmul.f32.gmra.mxu0 %v342
        %v406 = vpop.f32.mrf.mxu0
        %v407 = vadd.f32 0.0, %v406
        %408 = vmatmul.f32.gmra.mxu0 %v345
        %v409 = vpop.f32.mrf.mxu0
        %v410 = vadd.f32 0.0, %v409
        %411 = vdwg.mxu0
        %412 = vst [vmem:[%s246] sm:$0xff] %v365
        %413 = vst [vmem:[%s246 + $0x8] sm:$0xff] %v368
        %414 = vst [vmem:[%s246 + $0x10] sm:$0xff] %v371
        %415 = vst [vmem:[%s246 + $0x18] sm:$0xff] %v374
        %416 = vst [vmem:[%s246 + $0x20] sm:$0xff] %v377
        %417 = vst [vmem:[%s246 + $0x28] sm:$0xff] %v380
        %418 = vst [vmem:[%s246 + $0x30] sm:$0xff] %v383
        %419 = vst [vmem:[%s246 + $0x38] sm:$0xff] %v386
        %420 = vst [vmem:[%s246 + $0x40] sm:$0xff] %v389
        %421 = vst [vmem:[%s246 + $0x48] sm:$0xff] %v392
        %422 = vst [vmem:[%s246 + $0x50] sm:$0xff] %v395
        %423 = vst [vmem:[%s246 + $0x58] sm:$0xff] %v398
        %424 = vst [vmem:[%s246 + $0x60] sm:$0xff] %v401
        %425 = vst [vmem:[%s246 + $0x68] sm:$0xff] %v404
        %426 = vst [vmem:[%s246 + $0x70] sm:$0xff] %v407
        %427 = vst [vmem:[%s246 + $0x78] sm:$0xff] %v410
        %v428 = vld [vmem:[%s2] sm:$0x1]
        %v430 = vperm.slane %v428, 0
        %v432 = vmul.f32 %v365, %v430
        %v433 = vmul.f32 %v368, %v430
        %v434 = vmul.f32 %v371, %v430
        %v435 = vmul.f32 %v374, %v430
        %v436 = vmul.f32 %v377, %v430
        %v437 = vmul.f32 %v380, %v430
        %v438 = vmul.f32 %v383, %v430
        %v439 = vmul.f32 %v386, %v430
        %v440 = vmul.f32 %v389, %v430
        %v441 = vmul.f32 %v392, %v430
        %v442 = vmul.f32 %v395, %v430
        %v443 = vmul.f32 %v398, %v430
        %v444 = vmul.f32 %v401, %v430
        %v445 = vmul.f32 %v404, %v430
        %v446 = vmul.f32 %v407, %v430
        %v447 = vmul.f32 %v410, %v430
        %448 = vadd.xlane.f32.xlu0 %v432
        %v449 = vpop.xlane.xlu0 %448
        %450 = vadd.xlane.f32.xlu0 %v433
        %v451 = vpop.xlane.xlu0 %450
        %452 = vadd.xlane.f32.xlu0 %v434
        %v453 = vpop.xlane.xlu0 %452
        %454 = vadd.xlane.f32.xlu0 %v435
        %v455 = vpop.xlane.xlu0 %454
        %456 = vadd.xlane.f32.xlu0 %v436
        %v457 = vpop.xlane.xlu0 %456
        %458 = vadd.xlane.f32.xlu0 %v437
        %v459 = vpop.xlane.xlu0 %458
        %460 = vadd.xlane.f32.xlu0 %v438
        %v461 = vpop.xlane.xlu0 %460
        %462 = vadd.xlane.f32.xlu0 %v439
        %v463 = vpop.xlane.xlu0 %462
        %464 = vadd.xlane.f32.xlu0 %v440
        %v465 = vpop.xlane.xlu0 %464
        %466 = vadd.xlane.f32.xlu0 %v441
        %v467 = vpop.xlane.xlu0 %466
        %468 = vadd.xlane.f32.xlu0 %v442
        %v469 = vpop.xlane.xlu0 %468
        %470 = vadd.xlane.f32.xlu0 %v443
        %v471 = vpop.xlane.xlu0 %470
        %472 = vadd.xlane.f32.xlu0 %v444
        %v473 = vpop.xlane.xlu0 %472
        %474 = vadd.xlane.f32.xlu0 %v445
        %v475 = vpop.xlane.xlu0 %474
        %476 = vadd.xlane.f32.xlu0 %v446
        %v477 = vpop.xlane.xlu0 %476
        %478 = vadd.xlane.f32.xlu0 %v447
        %v479 = vpop.xlane.xlu0 %478
        %vm480 = vcmask 7168
        %481 = vst.msk [vmem:[%s272] sm:$0xff] %vm480, %v449
        %482 = vst.msk [vmem:[%s272 + $0x8] sm:$0xff] %vm480, %v451
        %483 = vst.msk [vmem:[%s272 + $0x10] sm:$0xff] %vm480, %v453
        %484 = vst.msk [vmem:[%s272 + $0x18] sm:$0xff] %vm480, %v455
        %485 = vst.msk [vmem:[%s272 + $0x20] sm:$0xff] %vm480, %v457
        %486 = vst.msk [vmem:[%s272 + $0x28] sm:$0xff] %vm480, %v459
        %487 = vst.msk [vmem:[%s272 + $0x30] sm:$0xff] %vm480, %v461
        %488 = vst.msk [vmem:[%s272 + $0x38] sm:$0xff] %vm480, %v463
        %489 = vst.msk [vmem:[%s272 + $0x40] sm:$0xff] %vm480, %v465
        %490 = vst.msk [vmem:[%s272 + $0x48] sm:$0xff] %vm480, %v467
        %491 = vst.msk [vmem:[%s272 + $0x50] sm:$0xff] %vm480, %v469
        %492 = vst.msk [vmem:[%s272 + $0x58] sm:$0xff] %vm480, %v471
        %493 = vst.msk [vmem:[%s272 + $0x60] sm:$0xff] %vm480, %v473
        %494 = vst.msk [vmem:[%s272 + $0x68] sm:$0xff] %vm480, %v475
        %495 = vst.msk [vmem:[%s272 + $0x70] sm:$0xff] %vm480, %v477
        %496 = vst.msk [vmem:[%s272 + $0x78] sm:$0xff] %vm480, %v479
        %v497 = vld [vmem:[%s3] sm:$0x1]
        %v499 = vperm.slane %v497, 0
        %v501 = vmul.f32 %v365, %v499
        %v502 = vmul.f32 %v368, %v499
        %v503 = vmul.f32 %v371, %v499
        %v504 = vmul.f32 %v374, %v499
        %v505 = vmul.f32 %v377, %v499
        %v506 = vmul.f32 %v380, %v499
        %v507 = vmul.f32 %v383, %v499
        %v508 = vmul.f32 %v386, %v499
        %v509 = vmul.f32 %v389, %v499
        %v510 = vmul.f32 %v392, %v499
        %v511 = vmul.f32 %v395, %v499
        %v512 = vmul.f32 %v398, %v499
        %v513 = vmul.f32 %v401, %v499
        %v514 = vmul.f32 %v404, %v499
        %v515 = vmul.f32 %v407, %v499
        %v516 = vmul.f32 %v410, %v499
        %517 = vadd.xlane.f32.xlu0 %v501
        %v518 = vpop.xlane.xlu0 %517
        %519 = vadd.xlane.f32.xlu0 %v502
        %v520 = vpop.xlane.xlu0 %519
        %521 = vadd.xlane.f32.xlu0 %v503
        %v522 = vpop.xlane.xlu0 %521
        %523 = vadd.xlane.f32.xlu0 %v504
        %v524 = vpop.xlane.xlu0 %523
        %525 = vadd.xlane.f32.xlu0 %v505
        %v526 = vpop.xlane.xlu0 %525
        %527 = vadd.xlane.f32.xlu0 %v506
        %v528 = vpop.xlane.xlu0 %527
        %529 = vadd.xlane.f32.xlu0 %v507
        %v530 = vpop.xlane.xlu0 %529
        %531 = vadd.xlane.f32.xlu0 %v508
        %v532 = vpop.xlane.xlu0 %531
        %533 = vadd.xlane.f32.xlu0 %v509
        %v534 = vpop.xlane.xlu0 %533
        %535 = vadd.xlane.f32.xlu0 %v510
        %v536 = vpop.xlane.xlu0 %535
        %537 = vadd.xlane.f32.xlu0 %v511
        %v538 = vpop.xlane.xlu0 %537
        %539 = vadd.xlane.f32.xlu0 %v512
        %v540 = vpop.xlane.xlu0 %539
        %541 = vadd.xlane.f32.xlu0 %v513
        %v542 = vpop.xlane.xlu0 %541
        %543 = vadd.xlane.f32.xlu0 %v514
        %v544 = vpop.xlane.xlu0 %543
        %545 = vadd.xlane.f32.xlu0 %v515
        %v546 = vpop.xlane.xlu0 %545
        %547 = vadd.xlane.f32.xlu0 %v516
        %v548 = vpop.xlane.xlu0 %547
        %549 = vst.msk [vmem:[%s278] sm:$0xff] %vm480, %v518
        %550 = vst.msk [vmem:[%s278 + $0x8] sm:$0xff] %vm480, %v520
        %551 = vst.msk [vmem:[%s278 + $0x10] sm:$0xff] %vm480, %v522
        %552 = vst.msk [vmem:[%s278 + $0x18] sm:$0xff] %vm480, %v524
        %553 = vst.msk [vmem:[%s278 + $0x20] sm:$0xff] %vm480, %v526
        %554 = vst.msk [vmem:[%s278 + $0x28] sm:$0xff] %vm480, %v528
        %555 = vst.msk [vmem:[%s278 + $0x30] sm:$0xff] %vm480, %v530
        %556 = vst.msk [vmem:[%s278 + $0x38] sm:$0xff] %vm480, %v532
        %557 = vst.msk [vmem:[%s278 + $0x40] sm:$0xff] %vm480, %v534
        %558 = vst.msk [vmem:[%s278 + $0x48] sm:$0xff] %vm480, %v536
        %559 = vst.msk [vmem:[%s278 + $0x50] sm:$0xff] %vm480, %v538
        %560 = vst.msk [vmem:[%s278 + $0x58] sm:$0xff] %vm480, %v540
        %561 = vst.msk [vmem:[%s278 + $0x60] sm:$0xff] %vm480, %v542
        %562 = vst.msk [vmem:[%s278 + $0x68] sm:$0xff] %vm480, %v544
        %563 = vst.msk [vmem:[%s278 + $0x70] sm:$0xff] %vm480, %v546
        %564 = vst.msk [vmem:[%s278 + $0x78] sm:$0xff] %vm480, %v548
        %s565 = sand.u32 %s118, 1
        %s566 = scalar_lea.sflag [#allocation3], %s565
        %s567 = sand.u32 %s118, 1
        %s568 = smul.addr %s567, 128
        %s569 = scalar_lea.vmem [#allocation2], %s568
        %s570 = smul.u32 16, %s21
        %p571 = scmp.lt.s32.totalorder %s570, 31
        %s572 = scalar_select %p571, %s570, 31
        %s573 = smul.addr %s572, 8
        %s574 = scalar_lea.vmem %s5, %s573
        %s575 = smul.u32 16, %s21
        %p576 = scmp.lt.s32.totalorder %s575, 31
        %s577 = scalar_select %p576, %s575, 31
        %s578 = smul.addr %s577, 8
        %s579 = scalar_lea.vmem %s6, %s578
        // Predicated region
        $region37: #{tpu_custom_call.1} parent=35 // pred_check
          %p580 = pneg %p128
        $region38: #{tpu_custom_call.1} parent=35 // pred_check_branch
          %582 = sbr.rel (%p580) target = $region40
        $region39: #{tpu_custom_call.1} parent=35 // pred_region
          %s583 = smul.u32 16, %s21
          %585 = vsyncadd %s566, 0
          %s586 = smul.addr %s583, 8
          %s587 = scalar_lea.hbm %s4, %s586
          %s588 = sshll.u32 %s569, 4
          %s589 = int_to_ptr.vmem [resolvable:$true] %s588
          %s590 = sshll.u32 %s587, 4
          %s591 = int_to_ptr.hbm [resolvable:$true] %s590
          %596 = dma.vmem_to_hbm [thread:$0]  %s589, 2048, %s591, %s566, 128, 128, 8
        $region40: #{tpu_custom_call.1} parent=35 // pred_fallthru
          _
        // Predicated region
        $region41: #{tpu_custom_call.1} parent=35 // pred_check
          %p597 = pneg %p154
        $region42: #{tpu_custom_call.1} parent=35 // pred_check_branch
          %599 = sbr.rel (%p597) target = $region44
        $region43: #{tpu_custom_call.1} parent=35 // pred_region
          %s600 = smul.u32 16, %s21
        $region44: #{tpu_custom_call.1} parent=35 // pred_fallthru
          _
        // Predicated region
        $region45: #{tpu_custom_call.1} parent=35 // pred_check
          %p601 = pneg %p180
        $region46: #{tpu_custom_call.1} parent=35 // pred_check_branch
          %603 = sbr.rel (%p601) target = $region48
        $region47: #{tpu_custom_call.1} parent=35 // pred_region
          %s604 = smul.u32 16, %s21
        $region48: #{tpu_custom_call.1} parent=35 // pred_fallthru
          _
      $region36: #{tpu_custom_call.1} parent=5 // pred_fallthru
        _
      %p605 = scmp.le.s32.totalorder 2, %s16
      // Predicated region
      $region49: #{tpu_custom_call.1} parent=5 // pred_check
        %p606 = pneg %p605
      $region50: #{tpu_custom_call.1} parent=5 // pred_check_branch
        %608 = sbr.rel (%p606) target = $region52
      $region51: #{tpu_custom_call.1} parent=5 // pred_region
        %s609 = ssub.s32 %s16, 2
        // Predicated region
        $region53: #{tpu_custom_call.1} parent=51 // pred_check
          %p610 = pneg %p134
        $region54: #{tpu_custom_call.1} parent=51 // pred_check_branch
          %612 = sbr.rel (%p610) target = $region56
        $region55: #{tpu_custom_call.1} parent=51 // pred_region
          %s613 = sand.u32 %s119, 1
          %s614 = scalar_lea.sflag [#allocation3], %s613
          %s615 = sand.u32 %s119, 1
          %s616 = smul.addr %s615, 128
          %s617 = scalar_lea.vmem [#allocation2], %s616
          %619 = dma.done %s614, 2048
        $region56: #{tpu_custom_call.1} parent=51 // pred_fallthru
          _
        // Predicated region
        $region57: #{tpu_custom_call.1} parent=51 // pred_check
          %p620 = pneg %p160
        $region58: #{tpu_custom_call.1} parent=51 // pred_check_branch
          %622 = sbr.rel (%p620) target = $region60
        $region59: #{tpu_custom_call.1} parent=51 // pred_region
          %s623 = smul.u32 16, %s22
          %p624 = scmp.lt.s32.totalorder %s623, 31
          %s625 = scalar_select %p624, %s623, 31
          %s626 = smul.addr %s625, 8
          %s627 = scalar_lea.vmem %s5, %s626
        $region60: #{tpu_custom_call.1} parent=51 // pred_fallthru
          _
        // Predicated region
        $region61: #{tpu_custom_call.1} parent=51 // pred_check
          %p628 = pneg %p186
        $region62: #{tpu_custom_call.1} parent=51 // pred_check_branch
          %630 = sbr.rel (%p628) target = $region64
        $region63: #{tpu_custom_call.1} parent=51 // pred_region
          %s631 = smul.u32 16, %s22
          %p632 = scmp.lt.s32.totalorder %s631, 31
          %s633 = scalar_select %p632, %s631, 31
          %s634 = smul.addr %s633, 8
          %s635 = scalar_lea.vmem %s6, %s634
        $region64: #{tpu_custom_call.1} parent=51 // pred_fallthru
          _
      $region52: #{tpu_custom_call.1} parent=5 // pred_fallthru
        _
    $region6: #{tpu_custom_call.1} parent=1 // loop_footer
      %s20 = sadd.s32 1, %s16
    $region7: #{tpu_custom_call.1} parent=1 // loop_footer_branch
      %15 = sbr.rel target = $region3
    $region8: #{tpu_custom_call.1} parent=1 // loop_exit
      _
    %636 = vsyncpa [#allocation3], 1
    %s637 = scalar_lea.sflag [#allocation3], 1
    %638 = vsyncpa %s637, 1

</llo_original>
